<compile_context>
chip_gen: v7x
topology: tpu7x:2x2x1
jax: 0.10.0
libtpu: 0.0.40
codegen_flags: <defaults>
</compile_context>

<pallas_src>
import jax
import jax.numpy as jnp
from jax.experimental import pallas as pl
from jax.experimental.pallas import tpu as pltpu


def _round_up(x, m):
    return ((x + m - 1) // m) * m


def _num_tensorcores(default=2):
    """Best-effort TensorCore count of the local part (v5e/v6e: 1, v7x: 2)."""
    try:
        info = pltpu.get_tpu_info()
        for attr in ("num_cores", "core_count", "num_tensorcores", "tensorcore_count"):
            v = getattr(info, attr, None)
            if isinstance(v, int) and v > 0:
                return v
    except Exception:
        pass
    try:
        v = getattr(jax.devices()[0], "num_cores", None)
        if isinstance(v, int) and v > 0:
            return v
    except Exception:
        pass
    return default


def _block_bytes(tc, hw, feat_itemsize, gate_itemsize):
    """Double-buffered VMEM footprint of one grid step's blocks (lane-padded)."""
    hw_pad = _round_up(hw, 128)
    feat = tc * hw_pad * feat_itemsize          # one (tc, HW) feature block
    gate = tc * 128 * gate_itemsize             # (tc, 1) lane-pads to (tc, 128)
    return 2 * (2 * feat + gate)                # in + out feature + gate; x2 buffers


def _pick_channel_tile(nc, hw, feat_itemsize, gate_itemsize, num_cores,
                       vmem_budget_bytes=16 << 20):
    """Largest channel tile that (a) divides NC, (b) is a multiple of 8 or the
    full extent, (c) yields at least `num_cores` grid steps (megacore), and
    (d) fits a conservative, lane-padding-aware double-buffered VMEM budget."""
    cands = [d for d in range(8, nc + 1, 8) if nc % d == 0]
    if nc not in cands:
        cands.append(nc)                        # full-extent block is always legal

    min_steps = max(1, num_cores)
    good = [d for d in cands
            if _block_bytes(d, hw, feat_itemsize, gate_itemsize) <= vmem_budget_bytes
            and nc // d >= min_steps]
    if good:
        return max(good)
    good = [d for d in cands
            if _block_bytes(d, hw, feat_itemsize, gate_itemsize) <= vmem_budget_bytes]
    if good:
        return max(good)
    # Nothing fits the budget (very large H*W): use the smallest tile and rely
    # on the caller's vmem_limit_bytes headroom.
    # TODO(synk): tile the spatial (H*W) axis as well for very large SE stages.
    return min(cands)


def se_sigmoid_mul(x_gate, x_feat, *, gate_is_logits=True, interpret=False):
    """sigmoid(x_gate) * x_feat with x_gate: [N,C,1,1], x_feat: [N,C,H,W].

    If gate_is_logits=False the gate is assumed to be already activated
    upstream (e.g. fused into the FC that produced it) and the kernel only
    does the broadcast-multiply.
    """
    N, C, H, W = x_feat.shape
    assert x_gate.shape == (N, C, 1, 1)

    NC, HW = N * C, H * W
    gate2d = x_gate.reshape(NC, 1)
    feat2d = x_feat.reshape(NC, HW)

    num_cores = _num_tensorcores()
    tc = _pick_channel_tile(NC, HW, feat2d.dtype.itemsize, gate2d.dtype.itemsize,
                            num_cores)
    num_steps = NC // tc

    # Explicit scoped-VMEM limit with headroom over the (lane-padded) estimate;
    # 48 MiB is below physical VMEM on every part (v7x: 64 MiB per TensorCore).
    need = _block_bytes(tc, HW, feat2d.dtype.itemsize, gate2d.dtype.itemsize)
    vmem_limit = int(min(48 << 20, max(16 << 20, 2 * need)))

    def kernel(gate_ref, x_ref, o_ref):
        # gate_ref: (tc, 1) per-step gate column; x_ref: (tc, HW) feature slab.
        g = gate_ref[...]
        if gate_is_logits:
            g = jax.nn.sigmoid(g.astype(jnp.float32))   # EUP, f32 internally
        o_ref[...] = (g * x_ref[...]).astype(o_ref.dtype)

    cost = pl.CostEstimate(
        flops=NC * HW,                                     # one multiply / element
        transcendentals=NC if gate_is_logits else 0,       # one sigmoid / channel
        bytes_accessed=2 * NC * HW * feat2d.dtype.itemsize
                       + NC * gate2d.dtype.itemsize,
    )

    out2d = pl.pallas_call(
        kernel,
        out_shape=jax.ShapeDtypeStruct((NC, HW), x_feat.dtype),
        grid=(num_steps,),
        in_specs=[
            pl.BlockSpec((tc, 1), lambda i: (i, 0)),       # per-step gate column
            pl.BlockSpec((tc, HW), lambda i: (i, 0)),      # feature slab
        ],
        out_specs=pl.BlockSpec((tc, HW), lambda i: (i, 0)),
        compiler_params=pltpu.CompilerParams(
            dimension_semantics=("parallel",),
            vmem_limit_bytes=vmem_limit,
        ),
        cost_estimate=cost,
        interpret=interpret,
    )(gate2d, feat2d)

    return out2d.reshape(N, C, H, W)


if __name__ == "__main__":
    # Actual module shapes (tiny: ~0.45 MB of features), so the real tiling
    # path is exercised (2 steps on multi-TC parts, 1-2 steps on 1-TC parts).
    N, C, H, W = 1, 2304, 7, 7

    key = jax.random.PRNGKey(0)
    k1, k2 = jax.random.split(key)
    x625 = jax.random.normal(k1, (N, C, H, W), dtype=jnp.float32)  # features
    x629 = jax.random.normal(k2, (N, C, 1, 1), dtype=jnp.float32)  # gate logits

    out = jax.block_until_ready(se_sigmoid_mul(x629, x625))

    # Correctness against the plain-JAX reference of the PyTorch semantics.
    ref = jax.nn.sigmoid(x629) * x625
    assert out.shape == (N, C, H, W)
    assert jnp.allclose(out, ref, atol=1e-6, rtol=1e-6)

    print("KERNEL_OK")
</pallas_src>

<mosaic_0001>
module attributes {stable_mosaic.version = 11 : i64} {
  func.func @kernel(%arg0: i32, %arg1: memref<1152x1xf32, #tpu.memory_space<vmem>>, %arg2: memref<1152x49xf32, #tpu.memory_space<vmem>>, %arg3: memref<1152x49xf32, #tpu.memory_space<vmem>>) attributes {dimension_semantics = [#tpu.dimension_semantics<parallel>], iteration_bounds = array<i64: 2>, scalar_prefetch = 0 : i64, scratch_operands = 0 : i64, tpu.core_type = #tpu.core_type<tc>, window_params = [{transform_indices = @transform_0, window_bounds = array<i64: 1152, 1>}, {transform_indices = @transform_1, window_bounds = array<i64: 1152, 49>}, {transform_indices = @transform_2, window_bounds = array<i64: 1152, 49>}]} {
    %c0 = arith.constant 0 : index
    %c0_0 = arith.constant 0 : index
    %0 = vector.load %arg1[%c0, %c0_0] : memref<1152x1xf32, #tpu.memory_space<vmem>>, vector<1152x1xf32>
    %1 = arith.negf %0 : vector<1152x1xf32>
    %2 = math.exp %1 : vector<1152x1xf32>
    %cst = arith.constant 1.000000e+00 : f32
    %3 = vector.broadcast %cst : f32 to vector<1152x1xf32>
    %4 = arith.addf %3, %2 : vector<1152x1xf32>
    %5 = arith.divf %3, %4 : vector<1152x1xf32>
    %c0_1 = arith.constant 0 : index
    %c0_2 = arith.constant 0 : index
    %6 = vector.load %arg2[%c0_1, %c0_2] : memref<1152x49xf32, #tpu.memory_space<vmem>>, vector<1152x49xf32>
    %7 = vector.broadcast %5 : vector<1152x1xf32> to vector<1152x49xf32>
    %8 = arith.mulf %7, %6 : vector<1152x49xf32>
    %c0_3 = arith.constant 0 : index
    %c0_4 = arith.constant 0 : index
    %9 = vector.load %arg3[%c0_3, %c0_4] : memref<1152x49xf32, #tpu.memory_space<vmem>>, vector<1152x49xf32>
    tpu.vector_store %arg3[%c0_3, %c0_4], %8 {strides = array<i32>} : memref<1152x49xf32, #tpu.memory_space<vmem>>, vector<1152x49xf32>,
    return
  }
  func.func @transform_0(%arg0: i32) -> (i32, i32) {
    %c0_i32 = arith.constant 0 : i32
    %c0_i32_0 = arith.constant 0 : i32
    return %arg0, %c0_i32 : i32, i32
  }
  func.func @transform_1(%arg0: i32) -> (i32, i32) {
    %c0_i32 = arith.constant 0 : i32
    %c0_i32_0 = arith.constant 0 : i32
    return %arg0, %c0_i32 : i32, i32
  }
  func.func @transform_2(%arg0: i32) -> (i32, i32) {
    %c0_i32 = arith.constant 0 : i32
    %c0_i32_0 = arith.constant 0 : i32
    return %arg0, %c0_i32 : i32, i32
  }
}

</mosaic_0001>

<llo_original>
// kernel: tpu_custom_call.1
$region0: #{tpu_custom_call.1}
  #allocation0 [shape = 'u32[]', space=smem, size = 0x4, offset = 0x4, fixed_abs, tag = 'smem constant byte address 0x4 - core index']
  #allocation1 [shape = 'u32[144,128]{1,0:T(1,128)}', space=vmem, size = 0x12000, scoped, tag = 'internal scratch']
  %s0 = inlined_call_operand.vmem [shape: f32[2304,1], index: 0, kind: input, shape index: {}]
  %s1 = inlined_call_operand.vmem [shape: f32[2304,49], index: 1, kind: input, shape index: {}]
  %s2 = inlined_call_operand.vmem [shape: f32[2304,49], index: 2, kind: output, shape index: {}]
  %s3 = sld [smem:[#allocation0]]
  $region41: #{tpu_custom_call.1} parent=0
    _
  %s5 = ssub.s32 1, %s3
  %s6 = scalar_select 0, %s5, %s3
  loop: start=0, step=1, limit=4
  $region2: #{tpu_custom_call.1} parent=0 // loop_pre_header
    _
  $region3: #{tpu_custom_call.1} parent=0 // loop_header
    %s8 = sphi 0, %s12
    %p9 = scmp.ge.s32.totalorder %s8, 4
    %s18 = sphi 0, %s20
    %s21 = sphi 0, %s18
    %s22 = sphi 0, %s21
    %s38 = sphi 0, %s22
    %s44 = sphi 0, %s46
    %s47 = sphi 0, %s44
    %s48 = sphi 0, %s47
    %s64 = sphi 0, %s48
    %s70 = sphi 0, %s72
    %s73 = sphi 0, %s70
    %s74 = sphi 0, %s73
    %s90 = sphi 0, %s74
  $region4: #{tpu_custom_call.1} parent=0 // loop_header_branch
    %11 = sbr.rel (%p9) target = $region8
  $region5: #{tpu_custom_call.1} parent=0 // loop_body
    %s13 = ssub.s32 %s8, 1
    %s14 = ssub.s32 %s8, 2
    %s15 = sadd.s32 %s8, 1
    %s16 = ssub.s32 %s8, %s15
    %p17 = scmp.eq.s32.totalorder %s16, 0
    %s19 = sadd.s32 %s18, 1
    %s20 = scalar_select %p17, %s18, %s19
    %p23 = pneg %p17
    %p24 = scmp.eq.s32.totalorder %s8, 1
    %p25 = por %p23, %p24
    %p26 = scmp.ne.s32.totalorder %s18, %s21
    %p27 = scmp.eq.s32.totalorder %s8, 0
    %p28 = por %p26, %p27
    %p29 = scmp.ne.s32.totalorder %s18, %s21
    %p30 = scmp.eq.s32.totalorder %s13, 1
    %p31 = por %p29, %p30
    %p32 = scmp.ne.s32.totalorder %s21, %s22
    %p33 = scmp.eq.s32.totalorder %s13, 0
    %p34 = por %p32, %p33
    %p35 = scmp.ne.s32.totalorder %s21, %s22
    %p36 = scmp.eq.s32.totalorder %s14, 1
    %p37 = por %p35, %p36
    %p39 = scmp.ne.s32.totalorder %s22, %s38
    %p40 = scmp.eq.s32.totalorder %s14, 0
    %p41 = por %p39, %p40
    %s42 = ssub.s32 %s8, %s15
    %p43 = scmp.eq.s32.totalorder %s42, 0
    %s45 = sadd.s32 %s44, 1
    %s46 = scalar_select %p43, %s44, %s45
    %p49 = pneg %p43
    %p50 = scmp.eq.s32.totalorder %s8, 1
    %p51 = por %p49, %p50
    %p52 = scmp.ne.s32.totalorder %s44, %s47
    %p53 = scmp.eq.s32.totalorder %s8, 0
    %p54 = por %p52, %p53
    %p55 = scmp.ne.s32.totalorder %s44, %s47
    %p56 = scmp.eq.s32.totalorder %s13, 1
    %p57 = por %p55, %p56
    %p58 = scmp.ne.s32.totalorder %s47, %s48
    %p59 = scmp.eq.s32.totalorder %s13, 0
    %p60 = por %p58, %p59
    %p61 = scmp.ne.s32.totalorder %s47, %s48
    %p62 = scmp.eq.s32.totalorder %s14, 1
    %p63 = por %p61, %p62
    %p65 = scmp.ne.s32.totalorder %s48, %s64
    %p66 = scmp.eq.s32.totalorder %s14, 0
    %p67 = por %p65, %p66
    %s68 = ssub.s32 %s8, %s15
    %p69 = scmp.eq.s32.totalorder %s68, 0
    %s71 = sadd.s32 %s70, 1
    %s72 = scalar_select %p69, %s70, %s71
    %p75 = pneg %p69
    %p76 = scmp.eq.s32.totalorder %s8, 1
    %p77 = por %p75, %p76
    %p78 = scmp.ne.s32.totalorder %s70, %s73
    %p79 = scmp.eq.s32.totalorder %s8, 0
    %p80 = por %p78, %p79
    %p81 = scmp.ne.s32.totalorder %s70, %s73
    %p82 = scmp.eq.s32.totalorder %s13, 1
    %p83 = por %p81, %p82
    %p84 = scmp.ne.s32.totalorder %s73, %s74
    %p85 = scmp.eq.s32.totalorder %s13, 0
    %p86 = por %p84, %p85
    %p87 = scmp.ne.s32.totalorder %s73, %s74
    %p88 = scmp.eq.s32.totalorder %s14, 1
    %p89 = por %p87, %p88
    %p91 = scmp.ne.s32.totalorder %s74, %s90
    %p92 = scmp.eq.s32.totalorder %s14, 0
    %p93 = por %p91, %p92
    %p94 = scmp.le.s32.totalorder 1, %s8
    %p95 = scmp.lt.s32.totalorder %s8, 3
    %p96 = pnand %p94, %p95
    %p97 = pneg %p96
    // Predicated region
    $region9: #{tpu_custom_call.1} parent=5 // pred_check
      _
    $region10: #{tpu_custom_call.1} parent=5 // pred_check_branch
      %99 = sbr.rel (%p96) target = $region12
    $region11: #{tpu_custom_call.1} parent=5 // pred_region
      %s100 = ssub.s32 %s8, 1
    $region12: #{tpu_custom_call.1} parent=5 // pred_fallthru
      _
    %p101 = scmp.lt.s32.totalorder %s8, 2
    // Predicated region
    $region13: #{tpu_custom_call.1} parent=5 // pred_check
      %p102 = pneg %p101
    $region14: #{tpu_custom_call.1} parent=5 // pred_check_branch
      %104 = sbr.rel (%p102) target = $region16
    $region15: #{tpu_custom_call.1} parent=5 // pred_region
      // Predicated region
      $region17: #{tpu_custom_call.1} parent=15 // pred_check
        %p105 = pneg %p28
      $region18: #{tpu_custom_call.1} parent=15 // pred_check_branch
        %107 = sbr.rel (%p105) target = $region20
      $region19: #{tpu_custom_call.1} parent=15 // pred_region
        %s108 = smul.u32 144, %s8
        %p109 = scmp.lt.s32.totalorder %s108, 287
        %s110 = scalar_select %p109, %s108, 287
        %s111 = smul.addr %s110, 8
        %s112 = scalar_lea.vmem %s0, %s111
        %s113 = smul.u32 144, %s8
      $region20: #{tpu_custom_call.1} parent=15 // pred_fallthru
        _
      // Predicated region
      $region21: #{tpu_custom_call.1} parent=15 // pred_check
        %p114 = pneg %p54
      $region22: #{tpu_custom_call.1} parent=15 // pred_check_branch
        %116 = sbr.rel (%p114) target = $region24
      $region23: #{tpu_custom_call.1} parent=15 // pred_region
        %s117 = smul.u32 144, %s8
        %p118 = scmp.lt.s32.totalorder %s117, 287
        %s119 = scalar_select %p118, %s117, 287
        %s120 = smul.addr %s119, 8
        %s121 = scalar_lea.vmem %s1, %s120
        %s122 = smul.u32 144, %s8
      $region24: #{tpu_custom_call.1} parent=15 // pred_fallthru
        _
    $region16: #{tpu_custom_call.1} parent=5 // pred_fallthru
      _
    %p123 = scmp.le.s32.totalorder 1, %s8
    %p124 = scmp.lt.s32.totalorder %s8, 3
    %p125 = pnand %p123, %p124
    %p126 = pneg %p125
    // Predicated region
    $region25: #{tpu_custom_call.1} parent=5 // pred_check
      _
    $region26: #{tpu_custom_call.1} parent=5 // pred_check_branch
      %128 = sbr.rel (%p125) target = $region28
    $region27: #{tpu_custom_call.1} parent=5 // pred_region
      %s129 = ssub.s32 %s8, 1
      %s130 = smul.u32 144, %s13
      %p131 = scmp.lt.s32.totalorder %s130, 287
      %s132 = scalar_select %p131, %s130, 287
      %s133 = smul.addr %s132, 8
      %s134 = scalar_lea.vmem %s0, %s133
      %p135 = pneg %p34
      %p136 = pneg %p31
      %s137 = smul.u32 144, %s13
      %p138 = scmp.lt.s32.totalorder %s137, 287
      %s139 = scalar_select %p138, %s137, 287
      %s140 = smul.addr %s139, 8
      %s141 = scalar_lea.vmem %s1, %s140
      %p142 = pneg %p60
      %p143 = pneg %p57
      %p144 = pneg %p86
      %p145 = pneg %p83
      %s146 = smul.u32 144, %s13
      %p147 = scmp.lt.s32.totalorder %s146, 287
      %s148 = scalar_select %p147, %s146, 287
      %s149 = smul.addr %s148, 8
      %s150 = scalar_lea.vmem %s2, %s149
      %s151 = smul.u32 144, %s13
      %p152 = scmp.lt.s32.totalorder %s151, 287
      %s153 = scalar_select %p152, %s151, 287
      %s154 = smul.addr %s153, 8
      %s155 = scalar_lea.vmem %s0, %s154
      %s156 = smul.u32 144, %s13
      %s157 = smul.u32 144, %s13
      %p158 = scmp.lt.s32.totalorder %s157, 287
      %s159 = scalar_select %p158, %s157, 287
      %s160 = smul.addr %s159, 8
      %s161 = scalar_lea.vmem %s1, %s160
      %s162 = smul.u32 144, %s13
      %s163 = smul.u32 144, %s13
      %p164 = scmp.lt.s32.totalorder %s163, 287
      %s165 = scalar_select %p164, %s163, 287
      %s166 = smul.addr %s165, 8
      %s167 = scalar_lea.vmem %s2, %s166
      %s168 = smul.u32 144, %s13
      %v169 = vld [vmem:[%s155] sm:$0xff]
      %v170 = vld [vmem:[%s155 + $0x8] sm:$0xff]
      %v171 = vld [vmem:[%s155 + $0x10] sm:$0xff]
      %v172 = vld [vmem:[%s155 + $0x18] sm:$0xff]
      %v173 = vld [vmem:[%s155 + $0x20] sm:$0xff]
      %v174 = vld [vmem:[%s155 + $0x28] sm:$0xff]
      %v175 = vld [vmem:[%s155 + $0x30] sm:$0xff]
      %v176 = vld [vmem:[%s155 + $0x38] sm:$0xff]
      %v177 = vld [vmem:[%s155 + $0x40] sm:$0xff]
      %v178 = vld [vmem:[%s155 + $0x48] sm:$0xff]
      %v179 = vld [vmem:[%s155 + $0x50] sm:$0xff]
      %v180 = vld [vmem:[%s155 + $0x58] sm:$0xff]
      %v181 = vld [vmem:[%s155 + $0x60] sm:$0xff]
      %v182 = vld [vmem:[%s155 + $0x68] sm:$0xff]
      %v183 = vld [vmem:[%s155 + $0x70] sm:$0xff]
      %v184 = vld [vmem:[%s155 + $0x78] sm:$0xff]
      %v185 = vld [vmem:[%s155 + $0x80] sm:$0xff]
      %v186 = vld [vmem:[%s155 + $0x88] sm:$0xff]
      %v187 = vld [vmem:[%s155 + $0x90] sm:$0xff]
      %v188 = vld [vmem:[%s155 + $0x98] sm:$0xff]
      %v189 = vld [vmem:[%s155 + $0xa0] sm:$0xff]
      %v190 = vld [vmem:[%s155 + $0xa8] sm:$0xff]
      %v191 = vld [vmem:[%s155 + $0xb0] sm:$0xff]
      %v192 = vld [vmem:[%s155 + $0xb8] sm:$0xff]
      %v193 = vld [vmem:[%s155 + $0xc0] sm:$0xff]
      %v194 = vld [vmem:[%s155 + $0xc8] sm:$0xff]
      %v195 = vld [vmem:[%s155 + $0xd0] sm:$0xff]
      %v196 = vld [vmem:[%s155 + $0xd8] sm:$0xff]
      %v197 = vld [vmem:[%s155 + $0xe0] sm:$0xff]
      %v198 = vld [vmem:[%s155 + $0xe8] sm:$0xff]
      %v199 = vld [vmem:[%s155 + $0xf0] sm:$0xff]
      %v200 = vld [vmem:[%s155 + $0xf8] sm:$0xff]
      %v201 = vld [vmem:[%s155 + $0x100] sm:$0xff]
      %v202 = vld [vmem:[%s155 + $0x108] sm:$0xff]
      %v203 = vld [vmem:[%s155 + $0x110] sm:$0xff]
      %v204 = vld [vmem:[%s155 + $0x118] sm:$0xff]
      %v205 = vld [vmem:[%s155 + $0x120] sm:$0xff]
      %v206 = vld [vmem:[%s155 + $0x128] sm:$0xff]
      %v207 = vld [vmem:[%s155 + $0x130] sm:$0xff]
      %v208 = vld [vmem:[%s155 + $0x138] sm:$0xff]
      %v209 = vld [vmem:[%s155 + $0x140] sm:$0xff]
      %v210 = vld [vmem:[%s155 + $0x148] sm:$0xff]
      %v211 = vld [vmem:[%s155 + $0x150] sm:$0xff]
      %v212 = vld [vmem:[%s155 + $0x158] sm:$0xff]
      %v213 = vld [vmem:[%s155 + $0x160] sm:$0xff]
      %v214 = vld [vmem:[%s155 + $0x168] sm:$0xff]
      %v215 = vld [vmem:[%s155 + $0x170] sm:$0xff]
      %v216 = vld [vmem:[%s155 + $0x178] sm:$0xff]
      %v217 = vld [vmem:[%s155 + $0x180] sm:$0xff]
      %v218 = vld [vmem:[%s155 + $0x188] sm:$0xff]
      %v219 = vld [vmem:[%s155 + $0x190] sm:$0xff]
      %v220 = vld [vmem:[%s155 + $0x198] sm:$0xff]
      %v221 = vld [vmem:[%s155 + $0x1a0] sm:$0xff]
      %v222 = vld [vmem:[%s155 + $0x1a8] sm:$0xff]
      %v223 = vld [vmem:[%s155 + $0x1b0] sm:$0xff]
      %v224 = vld [vmem:[%s155 + $0x1b8] sm:$0xff]
      %v225 = vld [vmem:[%s155 + $0x1c0] sm:$0xff]
      %v226 = vld [vmem:[%s155 + $0x1c8] sm:$0xff]
      %v227 = vld [vmem:[%s155 + $0x1d0] sm:$0xff]
      %v228 = vld [vmem:[%s155 + $0x1d8] sm:$0xff]
      %v229 = vld [vmem:[%s155 + $0x1e0] sm:$0xff]
      %v230 = vld [vmem:[%s155 + $0x1e8] sm:$0xff]
      %v231 = vld [vmem:[%s155 + $0x1f0] sm:$0xff]
      %v232 = vld [vmem:[%s155 + $0x1f8] sm:$0xff]
      %v233 = vld [vmem:[%s155 + $0x200] sm:$0xff]
      %v234 = vld [vmem:[%s155 + $0x208] sm:$0xff]
      %v235 = vld [vmem:[%s155 + $0x210] sm:$0xff]
      %v236 = vld [vmem:[%s155 + $0x218] sm:$0xff]
      %v237 = vld [vmem:[%s155 + $0x220] sm:$0xff]
      %v238 = vld [vmem:[%s155 + $0x228] sm:$0xff]
      %v239 = vld [vmem:[%s155 + $0x230] sm:$0xff]
      %v240 = vld [vmem:[%s155 + $0x238] sm:$0xff]
      %v241 = vld [vmem:[%s155 + $0x240] sm:$0xff]
      %v242 = vld [vmem:[%s155 + $0x248] sm:$0xff]
      %v243 = vld [vmem:[%s155 + $0x250] sm:$0xff]
      %v244 = vld [vmem:[%s155 + $0x258] sm:$0xff]
      %v245 = vld [vmem:[%s155 + $0x260] sm:$0xff]
      %v246 = vld [vmem:[%s155 + $0x268] sm:$0xff]
      %v247 = vld [vmem:[%s155 + $0x270] sm:$0xff]
      %v248 = vld [vmem:[%s155 + $0x278] sm:$0xff]
      %v249 = vld [vmem:[%s155 + $0x280] sm:$0xff]
      %v250 = vld [vmem:[%s155 + $0x288] sm:$0xff]
      %v251 = vld [vmem:[%s155 + $0x290] sm:$0xff]
      %v252 = vld [vmem:[%s155 + $0x298] sm:$0xff]
      %v253 = vld [vmem:[%s155 + $0x2a0] sm:$0xff]
      %v254 = vld [vmem:[%s155 + $0x2a8] sm:$0xff]
      %v255 = vld [vmem:[%s155 + $0x2b0] sm:$0xff]
      %v256 = vld [vmem:[%s155 + $0x2b8] sm:$0xff]
      %v257 = vld [vmem:[%s155 + $0x2c0] sm:$0xff]
      %v258 = vld [vmem:[%s155 + $0x2c8] sm:$0xff]
      %v259 = vld [vmem:[%s155 + $0x2d0] sm:$0xff]
      %v260 = vld [vmem:[%s155 + $0x2d8] sm:$0xff]
      %v261 = vld [vmem:[%s155 + $0x2e0] sm:$0xff]
      %v262 = vld [vmem:[%s155 + $0x2e8] sm:$0xff]
      %v263 = vld [vmem:[%s155 + $0x2f0] sm:$0xff]
      %v264 = vld [vmem:[%s155 + $0x2f8] sm:$0xff]
      %v265 = vld [vmem:[%s155 + $0x300] sm:$0xff]
      %v266 = vld [vmem:[%s155 + $0x308] sm:$0xff]
      %v267 = vld [vmem:[%s155 + $0x310] sm:$0xff]
      %v268 = vld [vmem:[%s155 + $0x318] sm:$0xff]
      %v269 = vld [vmem:[%s155 + $0x320] sm:$0xff]
      %v270 = vld [vmem:[%s155 + $0x328] sm:$0xff]
      %v271 = vld [vmem:[%s155 + $0x330] sm:$0xff]
      %v272 = vld [vmem:[%s155 + $0x338] sm:$0xff]
      %v273 = vld [vmem:[%s155 + $0x340] sm:$0xff]
      %v274 = vld [vmem:[%s155 + $0x348] sm:$0xff]
      %v275 = vld [vmem:[%s155 + $0x350] sm:$0xff]
      %v276 = vld [vmem:[%s155 + $0x358] sm:$0xff]
      %v277 = vld [vmem:[%s155 + $0x360] sm:$0xff]
      %v278 = vld [vmem:[%s155 + $0x368] sm:$0xff]
      %v279 = vld [vmem:[%s155 + $0x370] sm:$0xff]
      %v280 = vld [vmem:[%s155 + $0x378] sm:$0xff]
      %v281 = vld [vmem:[%s155 + $0x380] sm:$0xff]
      %v282 = vld [vmem:[%s155 + $0x388] sm:$0xff]
      %v283 = vld [vmem:[%s155 + $0x390] sm:$0xff]
      %v284 = vld [vmem:[%s155 + $0x398] sm:$0xff]
      %v285 = vld [vmem:[%s155 + $0x3a0] sm:$0xff]
      %v286 = vld [vmem:[%s155 + $0x3a8] sm:$0xff]
      %v287 = vld [vmem:[%s155 + $0x3b0] sm:$0xff]
      %v288 = vld [vmem:[%s155 + $0x3b8] sm:$0xff]
      %v289 = vld [vmem:[%s155 + $0x3c0] sm:$0xff]
      %v290 = vld [vmem:[%s155 + $0x3c8] sm:$0xff]
      %v291 = vld [vmem:[%s155 + $0x3d0] sm:$0xff]
      %v292 = vld [vmem:[%s155 + $0x3d8] sm:$0xff]
      %v293 = vld [vmem:[%s155 + $0x3e0] sm:$0xff]
      %v294 = vld [vmem:[%s155 + $0x3e8] sm:$0xff]
      %v295 = vld [vmem:[%s155 + $0x3f0] sm:$0xff]
      %v296 = vld [vmem:[%s155 + $0x3f8] sm:$0xff]
      %v297 = vld [vmem:[%s155 + $0x400] sm:$0xff]
      %v298 = vld [vmem:[%s155 + $0x408] sm:$0xff]
      %v299 = vld [vmem:[%s155 + $0x410] sm:$0xff]
      %v300 = vld [vmem:[%s155 + $0x418] sm:$0xff]
      %v301 = vld [vmem:[%s155 + $0x420] sm:$0xff]
      %v302 = vld [vmem:[%s155 + $0x428] sm:$0xff]
      %v303 = vld [vmem:[%s155 + $0x430] sm:$0xff]
      %v304 = vld [vmem:[%s155 + $0x438] sm:$0xff]
      %v305 = vld [vmem:[%s155 + $0x440] sm:$0xff]
      %v306 = vld [vmem:[%s155 + $0x448] sm:$0xff]
      %v307 = vld [vmem:[%s155 + $0x450] sm:$0xff]
      %v308 = vld [vmem:[%s155 + $0x458] sm:$0xff]
      %v309 = vld [vmem:[%s155 + $0x460] sm:$0xff]
      %v310 = vld [vmem:[%s155 + $0x468] sm:$0xff]
      %v311 = vld [vmem:[%s155 + $0x470] sm:$0xff]
      %v312 = vld [vmem:[%s155 + $0x478] sm:$0xff]
      %v313 = vxor.u32 %v169, 2147483648
      %v314 = vxor.u32 %v170, 2147483648
      %v315 = vxor.u32 %v171, 2147483648
      %v316 = vxor.u32 %v172, 2147483648
      %v317 = vxor.u32 %v173, 2147483648
      %v318 = vxor.u32 %v174, 2147483648
      %v319 = vxor.u32 %v175, 2147483648
      %v320 = vxor.u32 %v176, 2147483648
      %v321 = vxor.u32 %v177, 2147483648
      %v322 = vxor.u32 %v178, 2147483648
      %v323 = vxor.u32 %v179, 2147483648
      %v324 = vxor.u32 %v180, 2147483648
      %v325 = vxor.u32 %v181, 2147483648
      %v326 = vxor.u32 %v182, 2147483648
      %v327 = vxor.u32 %v183, 2147483648
      %v328 = vxor.u32 %v184, 2147483648
      %v329 = vxor.u32 %v185, 2147483648
      %v330 = vxor.u32 %v186, 2147483648
      %v331 = vxor.u32 %v187, 2147483648
      %v332 = vxor.u32 %v188, 2147483648
      %v333 = vxor.u32 %v189, 2147483648
      %v334 = vxor.u32 %v190, 2147483648
      %v335 = vxor.u32 %v191, 2147483648
      %v336 = vxor.u32 %v192, 2147483648
      %v337 = vxor.u32 %v193, 2147483648
      %v338 = vxor.u32 %v194, 2147483648
      %v339 = vxor.u32 %v195, 2147483648
      %v340 = vxor.u32 %v196, 2147483648
      %v341 = vxor.u32 %v197, 2147483648
      %v342 = vxor.u32 %v198, 2147483648
      %v343 = vxor.u32 %v199, 2147483648
      %v344 = vxor.u32 %v200, 2147483648
      %v345 = vxor.u32 %v201, 2147483648
      %v346 = vxor.u32 %v202, 2147483648
      %v347 = vxor.u32 %v203, 2147483648
      %v348 = vxor.u32 %v204, 2147483648
      %v349 = vxor.u32 %v205, 2147483648
      %v350 = vxor.u32 %v206, 2147483648
      %v351 = vxor.u32 %v207, 2147483648
      %v352 = vxor.u32 %v208, 2147483648
      %v353 = vxor.u32 %v209, 2147483648
      %v354 = vxor.u32 %v210, 2147483648
      %v355 = vxor.u32 %v211, 2147483648
      %v356 = vxor.u32 %v212, 2147483648
      %v357 = vxor.u32 %v213, 2147483648
      %v358 = vxor.u32 %v214, 2147483648
      %v359 = vxor.u32 %v215, 2147483648
      %v360 = vxor.u32 %v216, 2147483648
      %v361 = vxor.u32 %v217, 2147483648
      %v362 = vxor.u32 %v218, 2147483648
      %v363 = vxor.u32 %v219, 2147483648
      %v364 = vxor.u32 %v220, 2147483648
      %v365 = vxor.u32 %v221, 2147483648
      %v366 = vxor.u32 %v222, 2147483648
      %v367 = vxor.u32 %v223, 2147483648
      %v368 = vxor.u32 %v224, 2147483648
      %v369 = vxor.u32 %v225, 2147483648
      %v370 = vxor.u32 %v226, 2147483648
      %v371 = vxor.u32 %v227, 2147483648
      %v372 = vxor.u32 %v228, 2147483648
      %v373 = vxor.u32 %v229, 2147483648
      %v374 = vxor.u32 %v230, 2147483648
      %v375 = vxor.u32 %v231, 2147483648
      %v376 = vxor.u32 %v232, 2147483648
      %v377 = vxor.u32 %v233, 2147483648
      %v378 = vxor.u32 %v234, 2147483648
      %v379 = vxor.u32 %v235, 2147483648
      %v380 = vxor.u32 %v236, 2147483648
      %v381 = vxor.u32 %v237, 2147483648
      %v382 = vxor.u32 %v238, 2147483648
      %v383 = vxor.u32 %v239, 2147483648
      %v384 = vxor.u32 %v240, 2147483648
      %v385 = vxor.u32 %v241, 2147483648
      %v386 = vxor.u32 %v242, 2147483648
      %v387 = vxor.u32 %v243, 2147483648
      %v388 = vxor.u32 %v244, 2147483648
      %v389 = vxor.u32 %v245, 2147483648
      %v390 = vxor.u32 %v246, 2147483648
      %v391 = vxor.u32 %v247, 2147483648
      %v392 = vxor.u32 %v248, 2147483648
      %v393 = vxor.u32 %v249, 2147483648
      %v394 = vxor.u32 %v250, 2147483648
      %v395 = vxor.u32 %v251, 2147483648
      %v396 = vxor.u32 %v252, 2147483648
      %v397 = vxor.u32 %v253, 2147483648
      %v398 = vxor.u32 %v254, 2147483648
      %v399 = vxor.u32 %v255, 2147483648
      %v400 = vxor.u32 %v256, 2147483648
      %v401 = vxor.u32 %v257, 2147483648
      %v402 = vxor.u32 %v258, 2147483648
      %v403 = vxor.u32 %v259, 2147483648
      %v404 = vxor.u32 %v260, 2147483648
      %v405 = vxor.u32 %v261, 2147483648
      %v406 = vxor.u32 %v262, 2147483648
      %v407 = vxor.u32 %v263, 2147483648
      %v408 = vxor.u32 %v264, 2147483648
      %v409 = vxor.u32 %v265, 2147483648
      %v410 = vxor.u32 %v266, 2147483648
      %v411 = vxor.u32 %v267, 2147483648
      %v412 = vxor.u32 %v268, 2147483648
      %v413 = vxor.u32 %v269, 2147483648
      %v414 = vxor.u32 %v270, 2147483648
      %v415 = vxor.u32 %v271, 2147483648
      %v416 = vxor.u32 %v272, 2147483648
      %v417 = vxor.u32 %v273, 2147483648
      %v418 = vxor.u32 %v274, 2147483648
      %v419 = vxor.u32 %v275, 2147483648
      %v420 = vxor.u32 %v276, 2147483648
      %v421 = vxor.u32 %v277, 2147483648
      %v422 = vxor.u32 %v278, 2147483648
      %v423 = vxor.u32 %v279, 2147483648
      %v424 = vxor.u32 %v280, 2147483648
      %v425 = vxor.u32 %v281, 2147483648
      %v426 = vxor.u32 %v282, 2147483648
      %v427 = vxor.u32 %v283, 2147483648
      %v428 = vxor.u32 %v284, 2147483648
      %v429 = vxor.u32 %v285, 2147483648
      %v430 = vxor.u32 %v286, 2147483648
      %v431 = vxor.u32 %v287, 2147483648
      %v432 = vxor.u32 %v288, 2147483648
      %v433 = vxor.u32 %v289, 2147483648
      %v434 = vxor.u32 %v290, 2147483648
      %v435 = vxor.u32 %v291, 2147483648
      %v436 = vxor.u32 %v292, 2147483648
      %v437 = vxor.u32 %v293, 2147483648
      %v438 = vxor.u32 %v294, 2147483648
      %v439 = vxor.u32 %v295, 2147483648
      %v440 = vxor.u32 %v296, 2147483648
      %v441 = vxor.u32 %v297, 2147483648
      %v442 = vxor.u32 %v298, 2147483648
      %v443 = vxor.u32 %v299, 2147483648
      %v444 = vxor.u32 %v300, 2147483648
      %v445 = vxor.u32 %v301, 2147483648
      %v446 = vxor.u32 %v302, 2147483648
      %v447 = vxor.u32 %v303, 2147483648
      %v448 = vxor.u32 %v304, 2147483648
      %v449 = vxor.u32 %v305, 2147483648
      %v450 = vxor.u32 %v306, 2147483648
      %v451 = vxor.u32 %v307, 2147483648
      %v452 = vxor.u32 %v308, 2147483648
      %v453 = vxor.u32 %v309, 2147483648
      %v454 = vxor.u32 %v310, 2147483648
      %v455 = vxor.u32 %v311, 2147483648
      %v456 = vxor.u32 %v312, 2147483648
      %v457 = vmul.f32 %v313, 1.442695
      %v458 = vpow.pop %v457
      %v459 = vmul.f32 %v314, 1.442695
      %v460 = vpow.pop %v459
      %v461 = vmul.f32 %v315, 1.442695
      %v462 = vpow.pop %v461
      %v463 = vmul.f32 %v316, 1.442695
      %v464 = vpow.pop %v463
      %v465 = vmul.f32 %v317, 1.442695
      %v466 = vpow.pop %v465
      %v467 = vmul.f32 %v318, 1.442695
      %v468 = vpow.pop %v467
      %v469 = vmul.f32 %v319, 1.442695
      %v470 = vpow.pop %v469
      %v471 = vmul.f32 %v320, 1.442695
      %v472 = vpow.pop %v471
      %v473 = vmul.f32 %v321, 1.442695
      %v474 = vpow.pop %v473
      %v475 = vmul.f32 %v322, 1.442695
      %v476 = vpow.pop %v475
      %v477 = vmul.f32 %v323, 1.442695
      %v478 = vpow.pop %v477
      %v479 = vmul.f32 %v324, 1.442695
      %v480 = vpow.pop %v479
      %v481 = vmul.f32 %v325, 1.442695
      %v482 = vpow.pop %v481
      %v483 = vmul.f32 %v326, 1.442695
      %v484 = vpow.pop %v483
      %v485 = vmul.f32 %v327, 1.442695
      %v486 = vpow.pop %v485
      %v487 = vmul.f32 %v328, 1.442695
      %v488 = vpow.pop %v487
      %v489 = vmul.f32 %v329, 1.442695
      %v490 = vpow.pop %v489
      %v491 = vmul.f32 %v330, 1.442695
      %v492 = vpow.pop %v491
      %v493 = vmul.f32 %v331, 1.442695
      %v494 = vpow.pop %v493
      %v495 = vmul.f32 %v332, 1.442695
      %v496 = vpow.pop %v495
      %v497 = vmul.f32 %v333, 1.442695
      %v498 = vpow.pop %v497
      %v499 = vmul.f32 %v334, 1.442695
      %v500 = vpow.pop %v499
      %v501 = vmul.f32 %v335, 1.442695
      %v502 = vpow.pop %v501
      %v503 = vmul.f32 %v336, 1.442695
      %v504 = vpow.pop %v503
      %v505 = vmul.f32 %v337, 1.442695
      %v506 = vpow.pop %v505
      %v507 = vmul.f32 %v338, 1.442695
      %v508 = vpow.pop %v507
      %v509 = vmul.f32 %v339, 1.442695
      %v510 = vpow.pop %v509
      %v511 = vmul.f32 %v340, 1.442695
      %v512 = vpow.pop %v511
      %v513 = vmul.f32 %v341, 1.442695
      %v514 = vpow.pop %v513
      %v515 = vmul.f32 %v342, 1.442695
      %v516 = vpow.pop %v515
      %v517 = vmul.f32 %v343, 1.442695
      %v518 = vpow.pop %v517
      %v519 = vmul.f32 %v344, 1.442695
      %v520 = vpow.pop %v519
      %v521 = vmul.f32 %v345, 1.442695
      %v522 = vpow.pop %v521
      %v523 = vmul.f32 %v346, 1.442695
      %v524 = vpow.pop %v523
      %v525 = vmul.f32 %v347, 1.442695
      %v526 = vpow.pop %v525
      %v527 = vmul.f32 %v348, 1.442695
      %v528 = vpow.pop %v527
      %v529 = vmul.f32 %v349, 1.442695
      %v530 = vpow.pop %v529
      %v531 = vmul.f32 %v350, 1.442695
      %v532 = vpow.pop %v531
      %v533 = vmul.f32 %v351, 1.442695
      %v534 = vpow.pop %v533
      %v535 = vmul.f32 %v352, 1.442695
      %v536 = vpow.pop %v535
      %v537 = vmul.f32 %v353, 1.442695
      %v538 = vpow.pop %v537
      %v539 = vmul.f32 %v354, 1.442695
      %v540 = vpow.pop %v539
      %v541 = vmul.f32 %v355, 1.442695
      %v542 = vpow.pop %v541
      %v543 = vmul.f32 %v356, 1.442695
      %v544 = vpow.pop %v543
      %v545 = vmul.f32 %v357, 1.442695
      %v546 = vpow.pop %v545
      %v547 = vmul.f32 %v358, 1.442695
      %v548 = vpow.pop %v547
      %v549 = vmul.f32 %v359, 1.442695
      %v550 = vpow.pop %v549
      %v551 = vmul.f32 %v360, 1.442695
      %v552 = vpow.pop %v551
      %v553 = vmul.f32 %v361, 1.442695
      %v554 = vpow.pop %v553
      %v555 = vmul.f32 %v362, 1.442695
      %v556 = vpow.pop %v555
      %v557 = vmul.f32 %v363, 1.442695
      %v558 = vpow.pop %v557
      %v559 = vmul.f32 %v364, 1.442695
      %v560 = vpow.pop %v559
      %v561 = vmul.f32 %v365, 1.442695
      %v562 = vpow.pop %v561
      %v563 = vmul.f32 %v366, 1.442695
      %v564 = vpow.pop %v563
      %v565 = vmul.f32 %v367, 1.442695
      %v566 = vpow.pop %v565
      %v567 = vmul.f32 %v368, 1.442695
      %v568 = vpow.pop %v567
      %v569 = vmul.f32 %v369, 1.442695
      %v570 = vpow.pop %v569
      %v571 = vmul.f32 %v370, 1.442695
      %v572 = vpow.pop %v571
      %v573 = vmul.f32 %v371, 1.442695
      %v574 = vpow.pop %v573
      %v575 = vmul.f32 %v372, 1.442695
      %v576 = vpow.pop %v575
      %v577 = vmul.f32 %v373, 1.442695
      %v578 = vpow.pop %v577
      %v579 = vmul.f32 %v374, 1.442695
      %v580 = vpow.pop %v579
      %v581 = vmul.f32 %v375, 1.442695
      %v582 = vpow.pop %v581
      %v583 = vmul.f32 %v376, 1.442695
      %v584 = vpow.pop %v583
      %v585 = vmul.f32 %v377, 1.442695
      %v586 = vpow.pop %v585
      %v587 = vmul.f32 %v378, 1.442695
      %v588 = vpow.pop %v587
      %v589 = vmul.f32 %v379, 1.442695
      %v590 = vpow.pop %v589
      %v591 = vmul.f32 %v380, 1.442695
      %v592 = vpow.pop %v591
      %v593 = vmul.f32 %v381, 1.442695
      %v594 = vpow.pop %v593
      %v595 = vmul.f32 %v382, 1.442695
      %v596 = vpow.pop %v595
      %v597 = vmul.f32 %v383, 1.442695
      %v598 = vpow.pop %v597
      %v599 = vmul.f32 %v384, 1.442695
      %v600 = vpow.pop %v599
      %v601 = vmul.f32 %v385, 1.442695
      %v602 = vpow.pop %v601
      %v603 = vmul.f32 %v386, 1.442695
      %v604 = vpow.pop %v603
      %v605 = vmul.f32 %v387, 1.442695
      %v606 = vpow.pop %v605
      %v607 = vmul.f32 %v388, 1.442695
      %v608 = vpow.pop %v607
      %v609 = vmul.f32 %v389, 1.442695
      %v610 = vpow.pop %v609
      %v611 = vmul.f32 %v390, 1.442695
      %v612 = vpow.pop %v611
      %v613 = vmul.f32 %v391, 1.442695
      %v614 = vpow.pop %v613
      %v615 = vmul.f32 %v392, 1.442695
      %v616 = vpow.pop %v615
      %v617 = vmul.f32 %v393, 1.442695
      %v618 = vpow.pop %v617
      %v619 = vmul.f32 %v394, 1.442695
      %v620 = vpow.pop %v619
      %v621 = vmul.f32 %v395, 1.442695
      %v622 = vpow.pop %v621
      %v623 = vmul.f32 %v396, 1.442695
      %v624 = vpow.pop %v623
      %v625 = vmul.f32 %v397, 1.442695
      %v626 = vpow.pop %v625
      %v627 = vmul.f32 %v398, 1.442695
      %v628 = vpow.pop %v627
      %v629 = vmul.f32 %v399, 1.442695
      %v630 = vpow.pop %v629
      %v631 = vmul.f32 %v400, 1.442695
      %v632 = vpow.pop %v631
      %v633 = vmul.f32 %v401, 1.442695
      %v634 = vpow.pop %v633
      %v635 = vmul.f32 %v402, 1.442695
      %v636 = vpow.pop %v635
      %v637 = vmul.f32 %v403, 1.442695
      %v638 = vpow.pop %v637
      %v639 = vmul.f32 %v404, 1.442695
      %v640 = vpow.pop %v639
      %v641 = vmul.f32 %v405, 1.442695
      %v642 = vpow.pop %v641
      %v643 = vmul.f32 %v406, 1.442695
      %v644 = vpow.pop %v643
      %v645 = vmul.f32 %v407, 1.442695
      %v646 = vpow.pop %v645
      %v647 = vmul.f32 %v408, 1.442695
      %v648 = vpow.pop %v647
      %v649 = vmul.f32 %v409, 1.442695
      %v650 = vpow.pop %v649
      %v651 = vmul.f32 %v410, 1.442695
      %v652 = vpow.pop %v651
      %v653 = vmul.f32 %v411, 1.442695
      %v654 = vpow.pop %v653
      %v655 = vmul.f32 %v412, 1.442695
      %v656 = vpow.pop %v655
      %v657 = vmul.f32 %v413, 1.442695
      %v658 = vpow.pop %v657
      %v659 = vmul.f32 %v414, 1.442695
      %v660 = vpow.pop %v659
      %v661 = vmul.f32 %v415, 1.442695
      %v662 = vpow.pop %v661
      %v663 = vmul.f32 %v416, 1.442695
      %v664 = vpow.pop %v663
      %v665 = vmul.f32 %v417, 1.442695
      %v666 = vpow.pop %v665
      %v667 = vmul.f32 %v418, 1.442695
      %v668 = vpow.pop %v667
      %v669 = vmul.f32 %v419, 1.442695
      %v670 = vpow.pop %v669
      %v671 = vmul.f32 %v420, 1.442695
      %v672 = vpow.pop %v671
      %v673 = vmul.f32 %v421, 1.442695
      %v674 = vpow.pop %v673
      %v675 = vmul.f32 %v422, 1.442695
      %v676 = vpow.pop %v675
      %v677 = vmul.f32 %v423, 1.442695
      %v678 = vpow.pop %v677
      %v679 = vmul.f32 %v424, 1.442695
      %v680 = vpow.pop %v679
      %v681 = vmul.f32 %v425, 1.442695
      %v682 = vpow.pop %v681
      %v683 = vmul.f32 %v426, 1.442695
      %v684 = vpow.pop %v683
      %v685 = vmul.f32 %v427, 1.442695
      %v686 = vpow.pop %v685
      %v687 = vmul.f32 %v428, 1.442695
      %v688 = vpow.pop %v687
      %v689 = vmul.f32 %v429, 1.442695
      %v690 = vpow.pop %v689
      %v691 = vmul.f32 %v430, 1.442695
      %v692 = vpow.pop %v691
      %v693 = vmul.f32 %v431, 1.442695
      %v694 = vpow.pop %v693
      %v695 = vmul.f32 %v432, 1.442695
      %v696 = vpow.pop %v695
      %v697 = vmul.f32 %v433, 1.442695
      %v698 = vpow.pop %v697
      %v699 = vmul.f32 %v434, 1.442695
      %v700 = vpow.pop %v699
      %v701 = vmul.f32 %v435, 1.442695
      %v702 = vpow.pop %v701
      %v703 = vmul.f32 %v436, 1.442695
      %v704 = vpow.pop %v703
      %v705 = vmul.f32 %v437, 1.442695
      %v706 = vpow.pop %v705
      %v707 = vmul.f32 %v438, 1.442695
      %v708 = vpow.pop %v707
      %v709 = vmul.f32 %v439, 1.442695
      %v710 = vpow.pop %v709
      %v711 = vmul.f32 %v440, 1.442695
      %v712 = vpow.pop %v711
      %v713 = vmul.f32 %v441, 1.442695
      %v714 = vpow.pop %v713
      %v715 = vmul.f32 %v442, 1.442695
      %v716 = vpow.pop %v715
      %v717 = vmul.f32 %v443, 1.442695
      %v718 = vpow.pop %v717
      %v719 = vmul.f32 %v444, 1.442695
      %v720 = vpow.pop %v719
      %v721 = vmul.f32 %v445, 1.442695
      %v722 = vpow.pop %v721
      %v723 = vmul.f32 %v446, 1.442695
      %v724 = vpow.pop %v723
      %v725 = vmul.f32 %v447, 1.442695
      %v726 = vpow.pop %v725
      %v727 = vmul.f32 %v448, 1.442695
      %v728 = vpow.pop %v727
      %v729 = vmul.f32 %v449, 1.442695
      %v730 = vpow.pop %v729
      %v731 = vmul.f32 %v450, 1.442695
      %v732 = vpow.pop %v731
      %v733 = vmul.f32 %v451, 1.442695
      %v734 = vpow.pop %v733
      %v735 = vmul.f32 %v452, 1.442695
      %v736 = vpow.pop %v735
      %v737 = vmul.f32 %v453, 1.442695
      %v738 = vpow.pop %v737
      %v739 = vmul.f32 %v454, 1.442695
      %v740 = vpow.pop %v739
      %v741 = vmul.f32 %v455, 1.442695
      %v742 = vpow.pop %v741
      %v743 = vmul.f32 %v456, 1.442695
      %v744 = vpow.pop %v743
      %v745 = vadd.f32 %v458, 1.0
      %v746 = vadd.f32 %v460, 1.0
      %v747 = vadd.f32 %v462, 1.0
      %v748 = vadd.f32 %v464, 1.0
      %v749 = vadd.f32 %v466, 1.0
      %v750 = vadd.f32 %v468, 1.0
      %v751 = vadd.f32 %v470, 1.0
      %v752 = vadd.f32 %v472, 1.0
      %v753 = vadd.f32 %v474, 1.0
      %v754 = vadd.f32 %v476, 1.0
      %v755 = vadd.f32 %v478, 1.0
      %v756 = vadd.f32 %v480, 1.0
      %v757 = vadd.f32 %v482, 1.0
      %v758 = vadd.f32 %v484, 1.0
      %v759 = vadd.f32 %v486, 1.0
      %v760 = vadd.f32 %v488, 1.0
      %v761 = vadd.f32 %v490, 1.0
      %v762 = vadd.f32 %v492, 1.0
      %v763 = vadd.f32 %v494, 1.0
      %v764 = vadd.f32 %v496, 1.0
      %v765 = vadd.f32 %v498, 1.0
      %v766 = vadd.f32 %v500, 1.0
      %v767 = vadd.f32 %v502, 1.0
      %v768 = vadd.f32 %v504, 1.0
      %v769 = vadd.f32 %v506, 1.0
      %v770 = vadd.f32 %v508, 1.0
      %v771 = vadd.f32 %v510, 1.0
      %v772 = vadd.f32 %v512, 1.0
      %v773 = vadd.f32 %v514, 1.0
      %v774 = vadd.f32 %v516, 1.0
      %v775 = vadd.f32 %v518, 1.0
      %v776 = vadd.f32 %v520, 1.0
      %v777 = vadd.f32 %v522, 1.0
      %v778 = vadd.f32 %v524, 1.0
      %v779 = vadd.f32 %v526, 1.0
      %v780 = vadd.f32 %v528, 1.0
      %v781 = vadd.f32 %v530, 1.0
      %v782 = vadd.f32 %v532, 1.0
      %v783 = vadd.f32 %v534, 1.0
      %v784 = vadd.f32 %v536, 1.0
      %v785 = vadd.f32 %v538, 1.0
      %v786 = vadd.f32 %v540, 1.0
      %v787 = vadd.f32 %v542, 1.0
      %v788 = vadd.f32 %v544, 1.0
      %v789 = vadd.f32 %v546, 1.0
      %v790 = vadd.f32 %v548, 1.0
      %v791 = vadd.f32 %v550, 1.0
      %v792 = vadd.f32 %v552, 1.0
      %v793 = vadd.f32 %v554, 1.0
      %v794 = vadd.f32 %v556, 1.0
      %v795 = vadd.f32 %v558, 1.0
      %v796 = vadd.f32 %v560, 1.0
      %v797 = vadd.f32 %v562, 1.0
      %v798 = vadd.f32 %v564, 1.0
      %v799 = vadd.f32 %v566, 1.0
      %v800 = vadd.f32 %v568, 1.0
      %v801 = vadd.f32 %v570, 1.0
      %v802 = vadd.f32 %v572, 1.0
      %v803 = vadd.f32 %v574, 1.0
      %v804 = vadd.f32 %v576, 1.0
      %v805 = vadd.f32 %v578, 1.0
      %v806 = vadd.f32 %v580, 1.0
      %v807 = vadd.f32 %v582, 1.0
      %v808 = vadd.f32 %v584, 1.0
      %v809 = vadd.f32 %v586, 1.0
      %v810 = vadd.f32 %v588, 1.0
      %v811 = vadd.f32 %v590, 1.0
      %v812 = vadd.f32 %v592, 1.0
      %v813 = vadd.f32 %v594, 1.0
      %v814 = vadd.f32 %v596, 1.0
      %v815 = vadd.f32 %v598, 1.0
      %v816 = vadd.f32 %v600, 1.0
      %v817 = vadd.f32 %v602, 1.0
      %v818 = vadd.f32 %v604, 1.0
      %v819 = vadd.f32 %v606, 1.0
      %v820 = vadd.f32 %v608, 1.0
      %v821 = vadd.f32 %v610, 1.0
      %v822 = vadd.f32 %v612, 1.0
      %v823 = vadd.f32 %v614, 1.0
      %v824 = vadd.f32 %v616, 1.0
      %v825 = vadd.f32 %v618, 1.0
      %v826 = vadd.f32 %v620, 1.0
      %v827 = vadd.f32 %v622, 1.0
      %v828 = vadd.f32 %v624, 1.0
      %v829 = vadd.f32 %v626, 1.0
      %v830 = vadd.f32 %v628, 1.0
      %v831 = vadd.f32 %v630, 1.0
      %v832 = vadd.f32 %v632, 1.0
      %v833 = vadd.f32 %v634, 1.0
      %v834 = vadd.f32 %v636, 1.0
      %v835 = vadd.f32 %v638, 1.0
      %v836 = vadd.f32 %v640, 1.0
      %v837 = vadd.f32 %v642, 1.0
      %v838 = vadd.f32 %v644, 1.0
      %v839 = vadd.f32 %v646, 1.0
      %v840 = vadd.f32 %v648, 1.0
      %v841 = vadd.f32 %v650, 1.0
      %v842 = vadd.f32 %v652, 1.0
      %v843 = vadd.f32 %v654, 1.0
      %v844 = vadd.f32 %v656, 1.0
      %v845 = vadd.f32 %v658, 1.0
      %v846 = vadd.f32 %v660, 1.0
      %v847 = vadd.f32 %v662, 1.0
      %v848 = vadd.f32 %v664, 1.0
      %v849 = vadd.f32 %v666, 1.0
      %v850 = vadd.f32 %v668, 1.0
      %v851 = vadd.f32 %v670, 1.0
      %v852 = vadd.f32 %v672, 1.0
      %v853 = vadd.f32 %v674, 1.0
      %v854 = vadd.f32 %v676, 1.0
      %v855 = vadd.f32 %v678, 1.0
      %v856 = vadd.f32 %v680, 1.0
      %v857 = vadd.f32 %v682, 1.0
      %v858 = vadd.f32 %v684, 1.0
      %v859 = vadd.f32 %v686, 1.0
      %v860 = vadd.f32 %v688, 1.0
      %v861 = vadd.f32 %v690, 1.0
      %v862 = vadd.f32 %v692, 1.0
      %v863 = vadd.f32 %v694, 1.0
      %v864 = vadd.f32 %v696, 1.0
      %v865 = vadd.f32 %v698, 1.0
      %v866 = vadd.f32 %v700, 1.0
      %v867 = vadd.f32 %v702, 1.0
      %v868 = vadd.f32 %v704, 1.0
      %v869 = vadd.f32 %v706, 1.0
      %v870 = vadd.f32 %v708, 1.0
      %v871 = vadd.f32 %v710, 1.0
      %v872 = vadd.f32 %v712, 1.0
      %v873 = vadd.f32 %v714, 1.0
      %v874 = vadd.f32 %v716, 1.0
      %v875 = vadd.f32 %v718, 1.0
      %v876 = vadd.f32 %v720, 1.0
      %v877 = vadd.f32 %v722, 1.0
      %v878 = vadd.f32 %v724, 1.0
      %v879 = vadd.f32 %v726, 1.0
      %v880 = vadd.f32 %v728, 1.0
      %v881 = vadd.f32 %v730, 1.0
      %v882 = vadd.f32 %v732, 1.0
      %v883 = vadd.f32 %v734, 1.0
      %v884 = vadd.f32 %v736, 1.0
      %v885 = vadd.f32 %v738, 1.0
      %v886 = vadd.f32 %v740, 1.0
      %v887 = vadd.f32 %v742, 1.0
      %v888 = vadd.f32 %v744, 1.0
      %v889 = vrcp.pop %v745
      %v890 = vmul.f32 1.0, %v889
      %v891 = vrcp.pop %v746
      %v892 = vmul.f32 1.0, %v891
      %v893 = vrcp.pop %v747
      %v894 = vmul.f32 1.0, %v893
      %v895 = vrcp.pop %v748
      %v896 = vmul.f32 1.0, %v895
      %v897 = vrcp.pop %v749
      %v898 = vmul.f32 1.0, %v897
      %v899 = vrcp.pop %v750
      %v900 = vmul.f32 1.0, %v899
      %v901 = vrcp.pop %v751
      %v902 = vmul.f32 1.0, %v901
      %v903 = vrcp.pop %v752
      %v904 = vmul.f32 1.0, %v903
      %v905 = vrcp.pop %v753
      %v906 = vmul.f32 1.0, %v905
      %v907 = vrcp.pop %v754
      %v908 = vmul.f32 1.0, %v907
      %v909 = vrcp.pop %v755
      %v910 = vmul.f32 1.0, %v909
      %v911 = vrcp.pop %v756
      %v912 = vmul.f32 1.0, %v911
      %v913 = vrcp.pop %v757
      %v914 = vmul.f32 1.0, %v913
      %v915 = vrcp.pop %v758
      %v916 = vmul.f32 1.0, %v915
      %v917 = vrcp.pop %v759
      %v918 = vmul.f32 1.0, %v917
      %v919 = vrcp.pop %v760
      %v920 = vmul.f32 1.0, %v919
      %v921 = vrcp.pop %v761
      %v922 = vmul.f32 1.0, %v921
      %v923 = vrcp.pop %v762
      %v924 = vmul.f32 1.0, %v923
      %v925 = vrcp.pop %v763
      %v926 = vmul.f32 1.0, %v925
      %v927 = vrcp.pop %v764
      %v928 = vmul.f32 1.0, %v927
      %v929 = vrcp.pop %v765
      %v930 = vmul.f32 1.0, %v929
      %v931 = vrcp.pop %v766
      %v932 = vmul.f32 1.0, %v931
      %v933 = vrcp.pop %v767
      %v934 = vmul.f32 1.0, %v933
      %v935 = vrcp.pop %v768
      %v936 = vmul.f32 1.0, %v935
      %v937 = vrcp.pop %v769
      %v938 = vmul.f32 1.0, %v937
      %v939 = vrcp.pop %v770
      %v940 = vmul.f32 1.0, %v939
      %v941 = vrcp.pop %v771
      %v942 = vmul.f32 1.0, %v941
      %v943 = vrcp.pop %v772
      %v944 = vmul.f32 1.0, %v943
      %v945 = vrcp.pop %v773
      %v946 = vmul.f32 1.0, %v945
      %v947 = vrcp.pop %v774
      %v948 = vmul.f32 1.0, %v947
      %v949 = vrcp.pop %v775
      %v950 = vmul.f32 1.0, %v949
      %v951 = vrcp.pop %v776
      %v952 = vmul.f32 1.0, %v951
      %v953 = vrcp.pop %v777
      %v954 = vmul.f32 1.0, %v953
      %v955 = vrcp.pop %v778
      %v956 = vmul.f32 1.0, %v955
      %v957 = vrcp.pop %v779
      %v958 = vmul.f32 1.0, %v957
      %v959 = vrcp.pop %v780
      %v960 = vmul.f32 1.0, %v959
      %v961 = vrcp.pop %v781
      %v962 = vmul.f32 1.0, %v961
      %v963 = vrcp.pop %v782
      %v964 = vmul.f32 1.0, %v963
      %v965 = vrcp.pop %v783
      %v966 = vmul.f32 1.0, %v965
      %v967 = vrcp.pop %v784
      %v968 = vmul.f32 1.0, %v967
      %v969 = vrcp.pop %v785
      %v970 = vmul.f32 1.0, %v969
      %v971 = vrcp.pop %v786
      %v972 = vmul.f32 1.0, %v971
      %v973 = vrcp.pop %v787
      %v974 = vmul.f32 1.0, %v973
      %v975 = vrcp.pop %v788
      %v976 = vmul.f32 1.0, %v975
      %v977 = vrcp.pop %v789
      %v978 = vmul.f32 1.0, %v977
      %v979 = vrcp.pop %v790
      %v980 = vmul.f32 1.0, %v979
      %v981 = vrcp.pop %v791
      %v982 = vmul.f32 1.0, %v981
      %v983 = vrcp.pop %v792
      %v984 = vmul.f32 1.0, %v983
      %v985 = vrcp.pop %v793
      %v986 = vmul.f32 1.0, %v985
      %v987 = vrcp.pop %v794
      %v988 = vmul.f32 1.0, %v987
      %v989 = vrcp.pop %v795
      %v990 = vmul.f32 1.0, %v989
      %v991 = vrcp.pop %v796
      %v992 = vmul.f32 1.0, %v991
      %v993 = vrcp.pop %v797
      %v994 = vmul.f32 1.0, %v993
      %v995 = vrcp.pop %v798
      %v996 = vmul.f32 1.0, %v995
      %v997 = vrcp.pop %v799
      %v998 = vmul.f32 1.0, %v997
      %v999 = vrcp.pop %v800
      %v1000 = vmul.f32 1.0, %v999
      %v1001 = vrcp.pop %v801
      %v1002 = vmul.f32 1.0, %v1001
      %v1003 = vrcp.pop %v802
      %v1004 = vmul.f32 1.0, %v1003
      %v1005 = vrcp.pop %v803
      %v1006 = vmul.f32 1.0, %v1005
      %v1007 = vrcp.pop %v804
      %v1008 = vmul.f32 1.0, %v1007
      %v1009 = vrcp.pop %v805
      %v1010 = vmul.f32 1.0, %v1009
      %v1011 = vrcp.pop %v806
      %v1012 = vmul.f32 1.0, %v1011
      %v1013 = vrcp.pop %v807
      %v1014 = vmul.f32 1.0, %v1013
      %v1015 = vrcp.pop %v808
      %v1016 = vmul.f32 1.0, %v1015
      %v1017 = vrcp.pop %v809
      %v1018 = vmul.f32 1.0, %v1017
      %v1019 = vrcp.pop %v810
      %v1020 = vmul.f32 1.0, %v1019
      %v1021 = vrcp.pop %v811
      %v1022 = vmul.f32 1.0, %v1021
      %v1023 = vrcp.pop %v812
      %v1024 = vmul.f32 1.0, %v1023
      %v1025 = vrcp.pop %v813
      %v1026 = vmul.f32 1.0, %v1025
      %v1027 = vrcp.pop %v814
      %v1028 = vmul.f32 1.0, %v1027
      %v1029 = vrcp.pop %v815
      %v1030 = vmul.f32 1.0, %v1029
      %v1031 = vrcp.pop %v816
      %v1032 = vmul.f32 1.0, %v1031
      %v1033 = vrcp.pop %v817
      %v1034 = vmul.f32 1.0, %v1033
      %v1035 = vrcp.pop %v818
      %v1036 = vmul.f32 1.0, %v1035
      %v1037 = vrcp.pop %v819
      %v1038 = vmul.f32 1.0, %v1037
      %v1039 = vrcp.pop %v820
      %v1040 = vmul.f32 1.0, %v1039
      %v1041 = vrcp.pop %v821
      %v1042 = vmul.f32 1.0, %v1041
      %v1043 = vrcp.pop %v822
      %v1044 = vmul.f32 1.0, %v1043
      %v1045 = vrcp.pop %v823
      %v1046 = vmul.f32 1.0, %v1045
      %v1047 = vrcp.pop %v824
      %v1048 = vmul.f32 1.0, %v1047
      %v1049 = vrcp.pop %v825
      %v1050 = vmul.f32 1.0, %v1049
      %v1051 = vrcp.pop %v826
      %v1052 = vmul.f32 1.0, %v1051
      %v1053 = vrcp.pop %v827
      %v1054 = vmul.f32 1.0, %v1053
      %v1055 = vrcp.pop %v828
      %v1056 = vmul.f32 1.0, %v1055
      %v1057 = vrcp.pop %v829
      %v1058 = vmul.f32 1.0, %v1057
      %v1059 = vrcp.pop %v830
      %v1060 = vmul.f32 1.0, %v1059
      %v1061 = vrcp.pop %v831
      %v1062 = vmul.f32 1.0, %v1061
      %v1063 = vrcp.pop %v832
      %v1064 = vmul.f32 1.0, %v1063
      %v1065 = vrcp.pop %v833
      %v1066 = vmul.f32 1.0, %v1065
      %v1067 = vrcp.pop %v834
      %v1068 = vmul.f32 1.0, %v1067
      %v1069 = vrcp.pop %v835
      %v1070 = vmul.f32 1.0, %v1069
      %v1071 = vrcp.pop %v836
      %v1072 = vmul.f32 1.0, %v1071
      %v1073 = vrcp.pop %v837
      %v1074 = vmul.f32 1.0, %v1073
      %v1075 = vrcp.pop %v838
      %v1076 = vmul.f32 1.0, %v1075
      %v1077 = vrcp.pop %v839
      %v1078 = vmul.f32 1.0, %v1077
      %v1079 = vrcp.pop %v840
      %v1080 = vmul.f32 1.0, %v1079
      %v1081 = vrcp.pop %v841
      %v1082 = vmul.f32 1.0, %v1081
      %v1083 = vrcp.pop %v842
      %v1084 = vmul.f32 1.0, %v1083
      %v1085 = vrcp.pop %v843
      %v1086 = vmul.f32 1.0, %v1085
      %v1087 = vrcp.pop %v844
      %v1088 = vmul.f32 1.0, %v1087
      %v1089 = vrcp.pop %v845
      %v1090 = vmul.f32 1.0, %v1089
      %v1091 = vrcp.pop %v846
      %v1092 = vmul.f32 1.0, %v1091
      %v1093 = vrcp.pop %v847
      %v1094 = vmul.f32 1.0, %v1093
      %v1095 = vrcp.pop %v848
      %v1096 = vmul.f32 1.0, %v1095
      %v1097 = vrcp.pop %v849
      %v1098 = vmul.f32 1.0, %v1097
      %v1099 = vrcp.pop %v850
      %v1100 = vmul.f32 1.0, %v1099
      %v1101 = vrcp.pop %v851
      %v1102 = vmul.f32 1.0, %v1101
      %v1103 = vrcp.pop %v852
      %v1104 = vmul.f32 1.0, %v1103
      %v1105 = vrcp.pop %v853
      %v1106 = vmul.f32 1.0, %v1105
      %v1107 = vrcp.pop %v854
      %v1108 = vmul.f32 1.0, %v1107
      %v1109 = vrcp.pop %v855
      %v1110 = vmul.f32 1.0, %v1109
      %v1111 = vrcp.pop %v856
      %v1112 = vmul.f32 1.0, %v1111
      %v1113 = vrcp.pop %v857
      %v1114 = vmul.f32 1.0, %v1113
      %v1115 = vrcp.pop %v858
      %v1116 = vmul.f32 1.0, %v1115
      %v1117 = vrcp.pop %v859
      %v1118 = vmul.f32 1.0, %v1117
      %v1119 = vrcp.pop %v860
      %v1120 = vmul.f32 1.0, %v1119
      %v1121 = vrcp.pop %v861
      %v1122 = vmul.f32 1.0, %v1121
      %v1123 = vrcp.pop %v862
      %v1124 = vmul.f32 1.0, %v1123
      %v1125 = vrcp.pop %v863
      %v1126 = vmul.f32 1.0, %v1125
      %v1127 = vrcp.pop %v864
      %v1128 = vmul.f32 1.0, %v1127
      %v1129 = vrcp.pop %v865
      %v1130 = vmul.f32 1.0, %v1129
      %v1131 = vrcp.pop %v866
      %v1132 = vmul.f32 1.0, %v1131
      %v1133 = vrcp.pop %v867
      %v1134 = vmul.f32 1.0, %v1133
      %v1135 = vrcp.pop %v868
      %v1136 = vmul.f32 1.0, %v1135
      %v1137 = vrcp.pop %v869
      %v1138 = vmul.f32 1.0, %v1137
      %v1139 = vrcp.pop %v870
      %v1140 = vmul.f32 1.0, %v1139
      %v1141 = vrcp.pop %v871
      %v1142 = vmul.f32 1.0, %v1141
      %v1143 = vrcp.pop %v872
      %v1144 = vmul.f32 1.0, %v1143
      %v1145 = vrcp.pop %v873
      %v1146 = vmul.f32 1.0, %v1145
      %v1147 = vrcp.pop %v874
      %v1148 = vmul.f32 1.0, %v1147
      %v1149 = vrcp.pop %v875
      %v1150 = vmul.f32 1.0, %v1149
      %v1151 = vrcp.pop %v876
      %v1152 = vmul.f32 1.0, %v1151
      %v1153 = vrcp.pop %v877
      %v1154 = vmul.f32 1.0, %v1153
      %v1155 = vrcp.pop %v878
      %v1156 = vmul.f32 1.0, %v1155
      %v1157 = vrcp.pop %v879
      %v1158 = vmul.f32 1.0, %v1157
      %v1159 = vrcp.pop %v880
      %v1160 = vmul.f32 1.0, %v1159
      %v1161 = vrcp.pop %v881
      %v1162 = vmul.f32 1.0, %v1161
      %v1163 = vrcp.pop %v882
      %v1164 = vmul.f32 1.0, %v1163
      %v1165 = vrcp.pop %v883
      %v1166 = vmul.f32 1.0, %v1165
      %v1167 = vrcp.pop %v884
      %v1168 = vmul.f32 1.0, %v1167
      %v1169 = vrcp.pop %v885
      %v1170 = vmul.f32 1.0, %v1169
      %v1171 = vrcp.pop %v886
      %v1172 = vmul.f32 1.0, %v1171
      %v1173 = vrcp.pop %v887
      %v1174 = vmul.f32 1.0, %v1173
      %v1175 = vrcp.pop %v888
      %v1176 = vmul.f32 1.0, %v1175
      %v1177 = vld [vmem:[%s161] sm:$0xff]
      %v1178 = vld [vmem:[%s161 + $0x8] sm:$0xff]
      %v1179 = vld [vmem:[%s161 + $0x10] sm:$0xff]
      %v1180 = vld [vmem:[%s161 + $0x18] sm:$0xff]
      %v1181 = vld [vmem:[%s161 + $0x20] sm:$0xff]
      %v1182 = vld [vmem:[%s161 + $0x28] sm:$0xff]
      %v1183 = vld [vmem:[%s161 + $0x30] sm:$0xff]
      %v1184 = vld [vmem:[%s161 + $0x38] sm:$0xff]
      %v1185 = vld [vmem:[%s161 + $0x40] sm:$0xff]
      %v1186 = vld [vmem:[%s161 + $0x48] sm:$0xff]
      %v1187 = vld [vmem:[%s161 + $0x50] sm:$0xff]
      %v1188 = vld [vmem:[%s161 + $0x58] sm:$0xff]
      %v1189 = vld [vmem:[%s161 + $0x60] sm:$0xff]
      %v1190 = vld [vmem:[%s161 + $0x68] sm:$0xff]
      %v1191 = vld [vmem:[%s161 + $0x70] sm:$0xff]
      %v1192 = vld [vmem:[%s161 + $0x78] sm:$0xff]
      %v1193 = vld [vmem:[%s161 + $0x80] sm:$0xff]
      %v1194 = vld [vmem:[%s161 + $0x88] sm:$0xff]
      %v1195 = vld [vmem:[%s161 + $0x90] sm:$0xff]
      %v1196 = vld [vmem:[%s161 + $0x98] sm:$0xff]
      %v1197 = vld [vmem:[%s161 + $0xa0] sm:$0xff]
      %v1198 = vld [vmem:[%s161 + $0xa8] sm:$0xff]
      %v1199 = vld [vmem:[%s161 + $0xb0] sm:$0xff]
      %v1200 = vld [vmem:[%s161 + $0xb8] sm:$0xff]
      %v1201 = vld [vmem:[%s161 + $0xc0] sm:$0xff]
      %v1202 = vld [vmem:[%s161 + $0xc8] sm:$0xff]
      %v1203 = vld [vmem:[%s161 + $0xd0] sm:$0xff]
      %v1204 = vld [vmem:[%s161 + $0xd8] sm:$0xff]
      %v1205 = vld [vmem:[%s161 + $0xe0] sm:$0xff]
      %v1206 = vld [vmem:[%s161 + $0xe8] sm:$0xff]
      %v1207 = vld [vmem:[%s161 + $0xf0] sm:$0xff]
      %v1208 = vld [vmem:[%s161 + $0xf8] sm:$0xff]
      %v1209 = vld [vmem:[%s161 + $0x100] sm:$0xff]
      %v1210 = vld [vmem:[%s161 + $0x108] sm:$0xff]
      %v1211 = vld [vmem:[%s161 + $0x110] sm:$0xff]
      %v1212 = vld [vmem:[%s161 + $0x118] sm:$0xff]
      %v1213 = vld [vmem:[%s161 + $0x120] sm:$0xff]
      %v1214 = vld [vmem:[%s161 + $0x128] sm:$0xff]
      %v1215 = vld [vmem:[%s161 + $0x130] sm:$0xff]
      %v1216 = vld [vmem:[%s161 + $0x138] sm:$0xff]
      %v1217 = vld [vmem:[%s161 + $0x140] sm:$0xff]
      %v1218 = vld [vmem:[%s161 + $0x148] sm:$0xff]
      %v1219 = vld [vmem:[%s161 + $0x150] sm:$0xff]
      %v1220 = vld [vmem:[%s161 + $0x158] sm:$0xff]
      %v1221 = vld [vmem:[%s161 + $0x160] sm:$0xff]
      %v1222 = vld [vmem:[%s161 + $0x168] sm:$0xff]
      %v1223 = vld [vmem:[%s161 + $0x170] sm:$0xff]
      %v1224 = vld [vmem:[%s161 + $0x178] sm:$0xff]
      %v1225 = vld [vmem:[%s161 + $0x180] sm:$0xff]
      %v1226 = vld [vmem:[%s161 + $0x188] sm:$0xff]
      %v1227 = vld [vmem:[%s161 + $0x190] sm:$0xff]
      %v1228 = vld [vmem:[%s161 + $0x198] sm:$0xff]
      %v1229 = vld [vmem:[%s161 + $0x1a0] sm:$0xff]
      %v1230 = vld [vmem:[%s161 + $0x1a8] sm:$0xff]
      %v1231 = vld [vmem:[%s161 + $0x1b0] sm:$0xff]
      %v1232 = vld [vmem:[%s161 + $0x1b8] sm:$0xff]
      %v1233 = vld [vmem:[%s161 + $0x1c0] sm:$0xff]
      %v1234 = vld [vmem:[%s161 + $0x1c8] sm:$0xff]
      %v1235 = vld [vmem:[%s161 + $0x1d0] sm:$0xff]
      %v1236 = vld [vmem:[%s161 + $0x1d8] sm:$0xff]
      %v1237 = vld [vmem:[%s161 + $0x1e0] sm:$0xff]
      %v1238 = vld [vmem:[%s161 + $0x1e8] sm:$0xff]
      %v1239 = vld [vmem:[%s161 + $0x1f0] sm:$0xff]
      %v1240 = vld [vmem:[%s161 + $0x1f8] sm:$0xff]
      %v1241 = vld [vmem:[%s161 + $0x200] sm:$0xff]
      %v1242 = vld [vmem:[%s161 + $0x208] sm:$0xff]
      %v1243 = vld [vmem:[%s161 + $0x210] sm:$0xff]
      %v1244 = vld [vmem:[%s161 + $0x218] sm:$0xff]
      %v1245 = vld [vmem:[%s161 + $0x220] sm:$0xff]
      %v1246 = vld [vmem:[%s161 + $0x228] sm:$0xff]
      %v1247 = vld [vmem:[%s161 + $0x230] sm:$0xff]
      %v1248 = vld [vmem:[%s161 + $0x238] sm:$0xff]
      %v1249 = vld [vmem:[%s161 + $0x240] sm:$0xff]
      %v1250 = vld [vmem:[%s161 + $0x248] sm:$0xff]
      %v1251 = vld [vmem:[%s161 + $0x250] sm:$0xff]
      %v1252 = vld [vmem:[%s161 + $0x258] sm:$0xff]
      %v1253 = vld [vmem:[%s161 + $0x260] sm:$0xff]
      %v1254 = vld [vmem:[%s161 + $0x268] sm:$0xff]
      %v1255 = vld [vmem:[%s161 + $0x270] sm:$0xff]
      %v1256 = vld [vmem:[%s161 + $0x278] sm:$0xff]
      %v1257 = vld [vmem:[%s161 + $0x280] sm:$0xff]
      %v1258 = vld [vmem:[%s161 + $0x288] sm:$0xff]
      %v1259 = vld [vmem:[%s161 + $0x290] sm:$0xff]
      %v1260 = vld [vmem:[%s161 + $0x298] sm:$0xff]
      %v1261 = vld [vmem:[%s161 + $0x2a0] sm:$0xff]
      %v1262 = vld [vmem:[%s161 + $0x2a8] sm:$0xff]
      %v1263 = vld [vmem:[%s161 + $0x2b0] sm:$0xff]
      %v1264 = vld [vmem:[%s161 + $0x2b8] sm:$0xff]
      %v1265 = vld [vmem:[%s161 + $0x2c0] sm:$0xff]
      %v1266 = vld [vmem:[%s161 + $0x2c8] sm:$0xff]
      %v1267 = vld [vmem:[%s161 + $0x2d0] sm:$0xff]
      %v1268 = vld [vmem:[%s161 + $0x2d8] sm:$0xff]
      %v1269 = vld [vmem:[%s161 + $0x2e0] sm:$0xff]
      %v1270 = vld [vmem:[%s161 + $0x2e8] sm:$0xff]
      %v1271 = vld [vmem:[%s161 + $0x2f0] sm:$0xff]
      %v1272 = vld [vmem:[%s161 + $0x2f8] sm:$0xff]
      %v1273 = vld [vmem:[%s161 + $0x300] sm:$0xff]
      %v1274 = vld [vmem:[%s161 + $0x308] sm:$0xff]
      %v1275 = vld [vmem:[%s161 + $0x310] sm:$0xff]
      %v1276 = vld [vmem:[%s161 + $0x318] sm:$0xff]
      %v1277 = vld [vmem:[%s161 + $0x320] sm:$0xff]
      %v1278 = vld [vmem:[%s161 + $0x328] sm:$0xff]
      %v1279 = vld [vmem:[%s161 + $0x330] sm:$0xff]
      %v1280 = vld [vmem:[%s161 + $0x338] sm:$0xff]
      %v1281 = vld [vmem:[%s161 + $0x340] sm:$0xff]
      %v1282 = vld [vmem:[%s161 + $0x348] sm:$0xff]
      %v1283 = vld [vmem:[%s161 + $0x350] sm:$0xff]
      %v1284 = vld [vmem:[%s161 + $0x358] sm:$0xff]
      %v1285 = vld [vmem:[%s161 + $0x360] sm:$0xff]
      %v1286 = vld [vmem:[%s161 + $0x368] sm:$0xff]
      %v1287 = vld [vmem:[%s161 + $0x370] sm:$0xff]
      %v1288 = vld [vmem:[%s161 + $0x378] sm:$0xff]
      %v1289 = vld [vmem:[%s161 + $0x380] sm:$0xff]
      %v1290 = vld [vmem:[%s161 + $0x388] sm:$0xff]
      %v1291 = vld [vmem:[%s161 + $0x390] sm:$0xff]
      %v1292 = vld [vmem:[%s161 + $0x398] sm:$0xff]
      %v1293 = vld [vmem:[%s161 + $0x3a0] sm:$0xff]
      %v1294 = vld [vmem:[%s161 + $0x3a8] sm:$0xff]
      %v1295 = vld [vmem:[%s161 + $0x3b0] sm:$0xff]
      %v1296 = vld [vmem:[%s161 + $0x3b8] sm:$0xff]
      %v1297 = vld [vmem:[%s161 + $0x3c0] sm:$0xff]
      %v1298 = vld [vmem:[%s161 + $0x3c8] sm:$0xff]
      %v1299 = vld [vmem:[%s161 + $0x3d0] sm:$0xff]
      %v1300 = vld [vmem:[%s161 + $0x3d8] sm:$0xff]
      %v1301 = vld [vmem:[%s161 + $0x3e0] sm:$0xff]
      %v1302 = vld [vmem:[%s161 + $0x3e8] sm:$0xff]
      %v1303 = vld [vmem:[%s161 + $0x3f0] sm:$0xff]
      %v1304 = vld [vmem:[%s161 + $0x3f8] sm:$0xff]
      %v1305 = vld [vmem:[%s161 + $0x400] sm:$0xff]
      %v1306 = vld [vmem:[%s161 + $0x408] sm:$0xff]
      %v1307 = vld [vmem:[%s161 + $0x410] sm:$0xff]
      %v1308 = vld [vmem:[%s161 + $0x418] sm:$0xff]
      %v1309 = vld [vmem:[%s161 + $0x420] sm:$0xff]
      %v1310 = vld [vmem:[%s161 + $0x428] sm:$0xff]
      %v1311 = vld [vmem:[%s161 + $0x430] sm:$0xff]
      %v1312 = vld [vmem:[%s161 + $0x438] sm:$0xff]
      %v1313 = vld [vmem:[%s161 + $0x440] sm:$0xff]
      %v1314 = vld [vmem:[%s161 + $0x448] sm:$0xff]
      %v1315 = vld [vmem:[%s161 + $0x450] sm:$0xff]
      %v1316 = vld [vmem:[%s161 + $0x458] sm:$0xff]
      %v1317 = vld [vmem:[%s161 + $0x460] sm:$0xff]
      %v1318 = vld [vmem:[%s161 + $0x468] sm:$0xff]
      %v1319 = vld [vmem:[%s161 + $0x470] sm:$0xff]
      %v1320 = vld [vmem:[%s161 + $0x478] sm:$0xff]
      %1322 = vset.pattern.permute.xlu0 0
      %1323 = vperm.xlu0 %1322, %v890
      %v1324 = vpop.permute.xlu0 %1323
      %1327 = vset.pattern.permute.xlu0 0
      %1328 = vperm.xlu0 %1327, %v892
      %v1329 = vpop.permute.xlu0 %1328
      %1332 = vset.pattern.permute.xlu0 0
      %1333 = vperm.xlu0 %1332, %v894
      %v1334 = vpop.permute.xlu0 %1333
      %1337 = vset.pattern.permute.xlu0 0
      %1338 = vperm.xlu0 %1337, %v896
      %v1339 = vpop.permute.xlu0 %1338
      %1342 = vset.pattern.permute.xlu0 0
      %1343 = vperm.xlu0 %1342, %v898
      %v1344 = vpop.permute.xlu0 %1343
      %1347 = vset.pattern.permute.xlu0 0
      %1348 = vperm.xlu0 %1347, %v900
      %v1349 = vpop.permute.xlu0 %1348
      %1352 = vset.pattern.permute.xlu0 0
      %1353 = vperm.xlu0 %1352, %v902
      %v1354 = vpop.permute.xlu0 %1353
      %1357 = vset.pattern.permute.xlu0 0
      %1358 = vperm.xlu0 %1357, %v904
      %v1359 = vpop.permute.xlu0 %1358
      %1362 = vset.pattern.permute.xlu0 0
      %1363 = vperm.xlu0 %1362, %v906
      %v1364 = vpop.permute.xlu0 %1363
      %1367 = vset.pattern.permute.xlu0 0
      %1368 = vperm.xlu0 %1367, %v908
      %v1369 = vpop.permute.xlu0 %1368
      %1372 = vset.pattern.permute.xlu0 0
      %1373 = vperm.xlu0 %1372, %v910
      %v1374 = vpop.permute.xlu0 %1373
      %1377 = vset.pattern.permute.xlu0 0
      %1378 = vperm.xlu0 %1377, %v912
      %v1379 = vpop.permute.xlu0 %1378
      %1382 = vset.pattern.permute.xlu0 0
      %1383 = vperm.xlu0 %1382, %v914
      %v1384 = vpop.permute.xlu0 %1383
      %1387 = vset.pattern.permute.xlu0 0
      %1388 = vperm.xlu0 %1387, %v916
      %v1389 = vpop.permute.xlu0 %1388
      %1392 = vset.pattern.permute.xlu0 0
      %1393 = vperm.xlu0 %1392, %v918
      %v1394 = vpop.permute.xlu0 %1393
      %1397 = vset.pattern.permute.xlu0 0
      %1398 = vperm.xlu0 %1397, %v920
      %v1399 = vpop.permute.xlu0 %1398
      %1402 = vset.pattern.permute.xlu0 0
      %1403 = vperm.xlu0 %1402, %v922
      %v1404 = vpop.permute.xlu0 %1403
      %1407 = vset.pattern.permute.xlu0 0
      %1408 = vperm.xlu0 %1407, %v924
      %v1409 = vpop.permute.xlu0 %1408
      %1412 = vset.pattern.permute.xlu0 0
      %1413 = vperm.xlu0 %1412, %v926
      %v1414 = vpop.permute.xlu0 %1413
      %1417 = vset.pattern.permute.xlu0 0
      %1418 = vperm.xlu0 %1417, %v928
      %v1419 = vpop.permute.xlu0 %1418
      %1422 = vset.pattern.permute.xlu0 0
      %1423 = vperm.xlu0 %1422, %v930
      %v1424 = vpop.permute.xlu0 %1423
      %1427 = vset.pattern.permute.xlu0 0
      %1428 = vperm.xlu0 %1427, %v932
      %v1429 = vpop.permute.xlu0 %1428
      %1432 = vset.pattern.permute.xlu0 0
      %1433 = vperm.xlu0 %1432, %v934
      %v1434 = vpop.permute.xlu0 %1433
      %1437 = vset.pattern.permute.xlu0 0
      %1438 = vperm.xlu0 %1437, %v936
      %v1439 = vpop.permute.xlu0 %1438
      %1442 = vset.pattern.permute.xlu0 0
      %1443 = vperm.xlu0 %1442, %v938
      %v1444 = vpop.permute.xlu0 %1443
      %1447 = vset.pattern.permute.xlu0 0
      %1448 = vperm.xlu0 %1447, %v940
      %v1449 = vpop.permute.xlu0 %1448
      %1452 = vset.pattern.permute.xlu0 0
      %1453 = vperm.xlu0 %1452, %v942
      %v1454 = vpop.permute.xlu0 %1453
      %1457 = vset.pattern.permute.xlu0 0
      %1458 = vperm.xlu0 %1457, %v944
      %v1459 = vpop.permute.xlu0 %1458
      %1462 = vset.pattern.permute.xlu0 0
      %1463 = vperm.xlu0 %1462, %v946
      %v1464 = vpop.permute.xlu0 %1463
      %1467 = vset.pattern.permute.xlu0 0
      %1468 = vperm.xlu0 %1467, %v948
      %v1469 = vpop.permute.xlu0 %1468
      %1472 = vset.pattern.permute.xlu0 0
      %1473 = vperm.xlu0 %1472, %v950
      %v1474 = vpop.permute.xlu0 %1473
      %1477 = vset.pattern.permute.xlu0 0
      %1478 = vperm.xlu0 %1477, %v952
      %v1479 = vpop.permute.xlu0 %1478
      %1482 = vset.pattern.permute.xlu0 0
      %1483 = vperm.xlu0 %1482, %v954
      %v1484 = vpop.permute.xlu0 %1483
      %1487 = vset.pattern.permute.xlu0 0
      %1488 = vperm.xlu0 %1487, %v956
      %v1489 = vpop.permute.xlu0 %1488
      %1492 = vset.pattern.permute.xlu0 0
      %1493 = vperm.xlu0 %1492, %v958
      %v1494 = vpop.permute.xlu0 %1493
      %1497 = vset.pattern.permute.xlu0 0
      %1498 = vperm.xlu0 %1497, %v960
      %v1499 = vpop.permute.xlu0 %1498
      %1502 = vset.pattern.permute.xlu0 0
      %1503 = vperm.xlu0 %1502, %v962
      %v1504 = vpop.permute.xlu0 %1503
      %1507 = vset.pattern.permute.xlu0 0
      %1508 = vperm.xlu0 %1507, %v964
      %v1509 = vpop.permute.xlu0 %1508
      %1512 = vset.pattern.permute.xlu0 0
      %1513 = vperm.xlu0 %1512, %v966
      %v1514 = vpop.permute.xlu0 %1513
      %1517 = vset.pattern.permute.xlu0 0
      %1518 = vperm.xlu0 %1517, %v968
      %v1519 = vpop.permute.xlu0 %1518
      %1522 = vset.pattern.permute.xlu0 0
      %1523 = vperm.xlu0 %1522, %v970
      %v1524 = vpop.permute.xlu0 %1523
      %1527 = vset.pattern.permute.xlu0 0
      %1528 = vperm.xlu0 %1527, %v972
      %v1529 = vpop.permute.xlu0 %1528
      %1532 = vset.pattern.permute.xlu0 0
      %1533 = vperm.xlu0 %1532, %v974
      %v1534 = vpop.permute.xlu0 %1533
      %1537 = vset.pattern.permute.xlu0 0
      %1538 = vperm.xlu0 %1537, %v976
      %v1539 = vpop.permute.xlu0 %1538
      %1542 = vset.pattern.permute.xlu0 0
      %1543 = vperm.xlu0 %1542, %v978
      %v1544 = vpop.permute.xlu0 %1543
      %1547 = vset.pattern.permute.xlu0 0
      %1548 = vperm.xlu0 %1547, %v980
      %v1549 = vpop.permute.xlu0 %1548
      %1552 = vset.pattern.permute.xlu0 0
      %1553 = vperm.xlu0 %1552, %v982
      %v1554 = vpop.permute.xlu0 %1553
      %1557 = vset.pattern.permute.xlu0 0
      %1558 = vperm.xlu0 %1557, %v984
      %v1559 = vpop.permute.xlu0 %1558
      %1562 = vset.pattern.permute.xlu0 0
      %1563 = vperm.xlu0 %1562, %v986
      %v1564 = vpop.permute.xlu0 %1563
      %1567 = vset.pattern.permute.xlu0 0
      %1568 = vperm.xlu0 %1567, %v988
      %v1569 = vpop.permute.xlu0 %1568
      %1572 = vset.pattern.permute.xlu0 0
      %1573 = vperm.xlu0 %1572, %v990
      %v1574 = vpop.permute.xlu0 %1573
      %1577 = vset.pattern.permute.xlu0 0
      %1578 = vperm.xlu0 %1577, %v992
      %v1579 = vpop.permute.xlu0 %1578
      %1582 = vset.pattern.permute.xlu0 0
      %1583 = vperm.xlu0 %1582, %v994
      %v1584 = vpop.permute.xlu0 %1583
      %1587 = vset.pattern.permute.xlu0 0
      %1588 = vperm.xlu0 %1587, %v996
      %v1589 = vpop.permute.xlu0 %1588
      %1592 = vset.pattern.permute.xlu0 0
      %1593 = vperm.xlu0 %1592, %v998
      %v1594 = vpop.permute.xlu0 %1593
      %1597 = vset.pattern.permute.xlu0 0
      %1598 = vperm.xlu0 %1597, %v1000
      %v1599 = vpop.permute.xlu0 %1598
      %1602 = vset.pattern.permute.xlu0 0
      %1603 = vperm.xlu0 %1602, %v1002
      %v1604 = vpop.permute.xlu0 %1603
      %1607 = vset.pattern.permute.xlu0 0
      %1608 = vperm.xlu0 %1607, %v1004
      %v1609 = vpop.permute.xlu0 %1608
      %1612 = vset.pattern.permute.xlu0 0
      %1613 = vperm.xlu0 %1612, %v1006
      %v1614 = vpop.permute.xlu0 %1613
      %1617 = vset.pattern.permute.xlu0 0
      %1618 = vperm.xlu0 %1617, %v1008
      %v1619 = vpop.permute.xlu0 %1618
      %1622 = vset.pattern.permute.xlu0 0
      %1623 = vperm.xlu0 %1622, %v1010
      %v1624 = vpop.permute.xlu0 %1623
      %1627 = vset.pattern.permute.xlu0 0
      %1628 = vperm.xlu0 %1627, %v1012
      %v1629 = vpop.permute.xlu0 %1628
      %1632 = vset.pattern.permute.xlu0 0
      %1633 = vperm.xlu0 %1632, %v1014
      %v1634 = vpop.permute.xlu0 %1633
      %1637 = vset.pattern.permute.xlu0 0
      %1638 = vperm.xlu0 %1637, %v1016
      %v1639 = vpop.permute.xlu0 %1638
      %1642 = vset.pattern.permute.xlu0 0
      %1643 = vperm.xlu0 %1642, %v1018
      %v1644 = vpop.permute.xlu0 %1643
      %1647 = vset.pattern.permute.xlu0 0
      %1648 = vperm.xlu0 %1647, %v1020
      %v1649 = vpop.permute.xlu0 %1648
      %1652 = vset.pattern.permute.xlu0 0
      %1653 = vperm.xlu0 %1652, %v1022
      %v1654 = vpop.permute.xlu0 %1653
      %1657 = vset.pattern.permute.xlu0 0
      %1658 = vperm.xlu0 %1657, %v1024
      %v1659 = vpop.permute.xlu0 %1658
      %1662 = vset.pattern.permute.xlu0 0
      %1663 = vperm.xlu0 %1662, %v1026
      %v1664 = vpop.permute.xlu0 %1663
      %1667 = vset.pattern.permute.xlu0 0
      %1668 = vperm.xlu0 %1667, %v1028
      %v1669 = vpop.permute.xlu0 %1668
      %1672 = vset.pattern.permute.xlu0 0
      %1673 = vperm.xlu0 %1672, %v1030
      %v1674 = vpop.permute.xlu0 %1673
      %1677 = vset.pattern.permute.xlu0 0
      %1678 = vperm.xlu0 %1677, %v1032
      %v1679 = vpop.permute.xlu0 %1678
      %1682 = vset.pattern.permute.xlu0 0
      %1683 = vperm.xlu0 %1682, %v1034
      %v1684 = vpop.permute.xlu0 %1683
      %1687 = vset.pattern.permute.xlu0 0
      %1688 = vperm.xlu0 %1687, %v1036
      %v1689 = vpop.permute.xlu0 %1688
      %1692 = vset.pattern.permute.xlu0 0
      %1693 = vperm.xlu0 %1692, %v1038
      %v1694 = vpop.permute.xlu0 %1693
      %1697 = vset.pattern.permute.xlu0 0
      %1698 = vperm.xlu0 %1697, %v1040
      %v1699 = vpop.permute.xlu0 %1698
      %1702 = vset.pattern.permute.xlu0 0
      %1703 = vperm.xlu0 %1702, %v1042
      %v1704 = vpop.permute.xlu0 %1703
      %1707 = vset.pattern.permute.xlu0 0
      %1708 = vperm.xlu0 %1707, %v1044
      %v1709 = vpop.permute.xlu0 %1708
      %1712 = vset.pattern.permute.xlu0 0
      %1713 = vperm.xlu0 %1712, %v1046
      %v1714 = vpop.permute.xlu0 %1713
      %1717 = vset.pattern.permute.xlu0 0
      %1718 = vperm.xlu0 %1717, %v1048
      %v1719 = vpop.permute.xlu0 %1718
      %1722 = vset.pattern.permute.xlu0 0
      %1723 = vperm.xlu0 %1722, %v1050
      %v1724 = vpop.permute.xlu0 %1723
      %1727 = vset.pattern.permute.xlu0 0
      %1728 = vperm.xlu0 %1727, %v1052
      %v1729 = vpop.permute.xlu0 %1728
      %1732 = vset.pattern.permute.xlu0 0
      %1733 = vperm.xlu0 %1732, %v1054
      %v1734 = vpop.permute.xlu0 %1733
      %1737 = vset.pattern.permute.xlu0 0
      %1738 = vperm.xlu0 %1737, %v1056
      %v1739 = vpop.permute.xlu0 %1738
      %1742 = vset.pattern.permute.xlu0 0
      %1743 = vperm.xlu0 %1742, %v1058
      %v1744 = vpop.permute.xlu0 %1743
      %1747 = vset.pattern.permute.xlu0 0
      %1748 = vperm.xlu0 %1747, %v1060
      %v1749 = vpop.permute.xlu0 %1748
      %1752 = vset.pattern.permute.xlu0 0
      %1753 = vperm.xlu0 %1752, %v1062
      %v1754 = vpop.permute.xlu0 %1753
      %1757 = vset.pattern.permute.xlu0 0
      %1758 = vperm.xlu0 %1757, %v1064
      %v1759 = vpop.permute.xlu0 %1758
      %1762 = vset.pattern.permute.xlu0 0
      %1763 = vperm.xlu0 %1762, %v1066
      %v1764 = vpop.permute.xlu0 %1763
      %1767 = vset.pattern.permute.xlu0 0
      %1768 = vperm.xlu0 %1767, %v1068
      %v1769 = vpop.permute.xlu0 %1768
      %1772 = vset.pattern.permute.xlu0 0
      %1773 = vperm.xlu0 %1772, %v1070
      %v1774 = vpop.permute.xlu0 %1773
      %1777 = vset.pattern.permute.xlu0 0
      %1778 = vperm.xlu0 %1777, %v1072
      %v1779 = vpop.permute.xlu0 %1778
      %1782 = vset.pattern.permute.xlu0 0
      %1783 = vperm.xlu0 %1782, %v1074
      %v1784 = vpop.permute.xlu0 %1783
      %1787 = vset.pattern.permute.xlu0 0
      %1788 = vperm.xlu0 %1787, %v1076
      %v1789 = vpop.permute.xlu0 %1788
      %1792 = vset.pattern.permute.xlu0 0
      %1793 = vperm.xlu0 %1792, %v1078
      %v1794 = vpop.permute.xlu0 %1793
      %1797 = vset.pattern.permute.xlu0 0
      %1798 = vperm.xlu0 %1797, %v1080
      %v1799 = vpop.permute.xlu0 %1798
      %1802 = vset.pattern.permute.xlu0 0
      %1803 = vperm.xlu0 %1802, %v1082
      %v1804 = vpop.permute.xlu0 %1803
      %1807 = vset.pattern.permute.xlu0 0
      %1808 = vperm.xlu0 %1807, %v1084
      %v1809 = vpop.permute.xlu0 %1808
      %1812 = vset.pattern.permute.xlu0 0
      %1813 = vperm.xlu0 %1812, %v1086
      %v1814 = vpop.permute.xlu0 %1813
      %1817 = vset.pattern.permute.xlu0 0
      %1818 = vperm.xlu0 %1817, %v1088
      %v1819 = vpop.permute.xlu0 %1818
      %1822 = vset.pattern.permute.xlu0 0
      %1823 = vperm.xlu0 %1822, %v1090
      %v1824 = vpop.permute.xlu0 %1823
      %1827 = vset.pattern.permute.xlu0 0
      %1828 = vperm.xlu0 %1827, %v1092
      %v1829 = vpop.permute.xlu0 %1828
      %1832 = vset.pattern.permute.xlu0 0
      %1833 = vperm.xlu0 %1832, %v1094
      %v1834 = vpop.permute.xlu0 %1833
      %1837 = vset.pattern.permute.xlu0 0
      %1838 = vperm.xlu0 %1837, %v1096
      %v1839 = vpop.permute.xlu0 %1838
      %1842 = vset.pattern.permute.xlu0 0
      %1843 = vperm.xlu0 %1842, %v1098
      %v1844 = vpop.permute.xlu0 %1843
      %1847 = vset.pattern.permute.xlu0 0
      %1848 = vperm.xlu0 %1847, %v1100
      %v1849 = vpop.permute.xlu0 %1848
      %1852 = vset.pattern.permute.xlu0 0
      %1853 = vperm.xlu0 %1852, %v1102
      %v1854 = vpop.permute.xlu0 %1853
      %1857 = vset.pattern.permute.xlu0 0
      %1858 = vperm.xlu0 %1857, %v1104
      %v1859 = vpop.permute.xlu0 %1858
      %1862 = vset.pattern.permute.xlu0 0
      %1863 = vperm.xlu0 %1862, %v1106
      %v1864 = vpop.permute.xlu0 %1863
      %1867 = vset.pattern.permute.xlu0 0
      %1868 = vperm.xlu0 %1867, %v1108
      %v1869 = vpop.permute.xlu0 %1868
      %1872 = vset.pattern.permute.xlu0 0
      %1873 = vperm.xlu0 %1872, %v1110
      %v1874 = vpop.permute.xlu0 %1873
      %1877 = vset.pattern.permute.xlu0 0
      %1878 = vperm.xlu0 %1877, %v1112
      %v1879 = vpop.permute.xlu0 %1878
      %1882 = vset.pattern.permute.xlu0 0
      %1883 = vperm.xlu0 %1882, %v1114
      %v1884 = vpop.permute.xlu0 %1883
      %1887 = vset.pattern.permute.xlu0 0
      %1888 = vperm.xlu0 %1887, %v1116
      %v1889 = vpop.permute.xlu0 %1888
      %1892 = vset.pattern.permute.xlu0 0
      %1893 = vperm.xlu0 %1892, %v1118
      %v1894 = vpop.permute.xlu0 %1893
      %1897 = vset.pattern.permute.xlu0 0
      %1898 = vperm.xlu0 %1897, %v1120
      %v1899 = vpop.permute.xlu0 %1898
      %1902 = vset.pattern.permute.xlu0 0
      %1903 = vperm.xlu0 %1902, %v1122
      %v1904 = vpop.permute.xlu0 %1903
      %1907 = vset.pattern.permute.xlu0 0
      %1908 = vperm.xlu0 %1907, %v1124
      %v1909 = vpop.permute.xlu0 %1908
      %1912 = vset.pattern.permute.xlu0 0
      %1913 = vperm.xlu0 %1912, %v1126
      %v1914 = vpop.permute.xlu0 %1913
      %1917 = vset.pattern.permute.xlu0 0
      %1918 = vperm.xlu0 %1917, %v1128
      %v1919 = vpop.permute.xlu0 %1918
      %1922 = vset.pattern.permute.xlu0 0
      %1923 = vperm.xlu0 %1922, %v1130
      %v1924 = vpop.permute.xlu0 %1923
      %1927 = vset.pattern.permute.xlu0 0
      %1928 = vperm.xlu0 %1927, %v1132
      %v1929 = vpop.permute.xlu0 %1928
      %1932 = vset.pattern.permute.xlu0 0
      %1933 = vperm.xlu0 %1932, %v1134
      %v1934 = vpop.permute.xlu0 %1933
      %1937 = vset.pattern.permute.xlu0 0
      %1938 = vperm.xlu0 %1937, %v1136
      %v1939 = vpop.permute.xlu0 %1938
      %1942 = vset.pattern.permute.xlu0 0
      %1943 = vperm.xlu0 %1942, %v1138
      %v1944 = vpop.permute.xlu0 %1943
      %1947 = vset.pattern.permute.xlu0 0
      %1948 = vperm.xlu0 %1947, %v1140
      %v1949 = vpop.permute.xlu0 %1948
      %1952 = vset.pattern.permute.xlu0 0
      %1953 = vperm.xlu0 %1952, %v1142
      %v1954 = vpop.permute.xlu0 %1953
      %1957 = vset.pattern.permute.xlu0 0
      %1958 = vperm.xlu0 %1957, %v1144
      %v1959 = vpop.permute.xlu0 %1958
      %1962 = vset.pattern.permute.xlu0 0
      %1963 = vperm.xlu0 %1962, %v1146
      %v1964 = vpop.permute.xlu0 %1963
      %1967 = vset.pattern.permute.xlu0 0
      %1968 = vperm.xlu0 %1967, %v1148
      %v1969 = vpop.permute.xlu0 %1968
      %1972 = vset.pattern.permute.xlu0 0
      %1973 = vperm.xlu0 %1972, %v1150
      %v1974 = vpop.permute.xlu0 %1973
      %1977 = vset.pattern.permute.xlu0 0
      %1978 = vperm.xlu0 %1977, %v1152
      %v1979 = vpop.permute.xlu0 %1978
      %1982 = vset.pattern.permute.xlu0 0
      %1983 = vperm.xlu0 %1982, %v1154
      %v1984 = vpop.permute.xlu0 %1983
      %1987 = vset.pattern.permute.xlu0 0
      %1988 = vperm.xlu0 %1987, %v1156
      %v1989 = vpop.permute.xlu0 %1988
      %1992 = vset.pattern.permute.xlu0 0
      %1993 = vperm.xlu0 %1992, %v1158
      %v1994 = vpop.permute.xlu0 %1993
      %1997 = vset.pattern.permute.xlu0 0
      %1998 = vperm.xlu0 %1997, %v1160
      %v1999 = vpop.permute.xlu0 %1998
      %2002 = vset.pattern.permute.xlu0 0
      %2003 = vperm.xlu0 %2002, %v1162
      %v2004 = vpop.permute.xlu0 %2003
      %2007 = vset.pattern.permute.xlu0 0
      %2008 = vperm.xlu0 %2007, %v1164
      %v2009 = vpop.permute.xlu0 %2008
      %2012 = vset.pattern.permute.xlu0 0
      %2013 = vperm.xlu0 %2012, %v1166
      %v2014 = vpop.permute.xlu0 %2013
      %2017 = vset.pattern.permute.xlu0 0
      %2018 = vperm.xlu0 %2017, %v1168
      %v2019 = vpop.permute.xlu0 %2018
      %2022 = vset.pattern.permute.xlu0 0
      %2023 = vperm.xlu0 %2022, %v1170
      %v2024 = vpop.permute.xlu0 %2023
      %2027 = vset.pattern.permute.xlu0 0
      %2028 = vperm.xlu0 %2027, %v1172
      %v2029 = vpop.permute.xlu0 %2028
      %2032 = vset.pattern.permute.xlu0 0
      %2033 = vperm.xlu0 %2032, %v1174
      %v2034 = vpop.permute.xlu0 %2033
      %2037 = vset.pattern.permute.xlu0 0
      %2038 = vperm.xlu0 %2037, %v1176
      %v2039 = vpop.permute.xlu0 %2038
      %v2041 = vmul.f32 %v1324, %v1177
      %v2042 = vmul.f32 %v1329, %v1178
      %v2043 = vmul.f32 %v1334, %v1179
      %v2044 = vmul.f32 %v1339, %v1180
      %v2045 = vmul.f32 %v1344, %v1181
      %v2046 = vmul.f32 %v1349, %v1182
      %v2047 = vmul.f32 %v1354, %v1183
      %v2048 = vmul.f32 %v1359, %v1184
      %v2049 = vmul.f32 %v1364, %v1185
      %v2050 = vmul.f32 %v1369, %v1186
      %v2051 = vmul.f32 %v1374, %v1187
      %v2052 = vmul.f32 %v1379, %v1188
      %v2053 = vmul.f32 %v1384, %v1189
      %v2054 = vmul.f32 %v1389, %v1190
      %v2055 = vmul.f32 %v1394, %v1191
      %v2056 = vmul.f32 %v1399, %v1192
      %v2057 = vmul.f32 %v1404, %v1193
      %v2058 = vmul.f32 %v1409, %v1194
      %v2059 = vmul.f32 %v1414, %v1195
      %v2060 = vmul.f32 %v1419, %v1196
      %v2061 = vmul.f32 %v1424, %v1197
      %v2062 = vmul.f32 %v1429, %v1198
      %v2063 = vmul.f32 %v1434, %v1199
      %v2064 = vmul.f32 %v1439, %v1200
      %v2065 = vmul.f32 %v1444, %v1201
      %v2066 = vmul.f32 %v1449, %v1202
      %v2067 = vmul.f32 %v1454, %v1203
      %v2068 = vmul.f32 %v1459, %v1204
      %v2069 = vmul.f32 %v1464, %v1205
      %v2070 = vmul.f32 %v1469, %v1206
      %v2071 = vmul.f32 %v1474, %v1207
      %v2072 = vmul.f32 %v1479, %v1208
      %v2073 = vmul.f32 %v1484, %v1209
      %v2074 = vmul.f32 %v1489, %v1210
      %v2075 = vmul.f32 %v1494, %v1211
      %v2076 = vmul.f32 %v1499, %v1212
      %v2077 = vmul.f32 %v1504, %v1213
      %v2078 = vmul.f32 %v1509, %v1214
      %v2079 = vmul.f32 %v1514, %v1215
      %v2080 = vmul.f32 %v1519, %v1216
      %v2081 = vmul.f32 %v1524, %v1217
      %v2082 = vmul.f32 %v1529, %v1218
      %v2083 = vmul.f32 %v1534, %v1219
      %v2084 = vmul.f32 %v1539, %v1220
      %v2085 = vmul.f32 %v1544, %v1221
      %v2086 = vmul.f32 %v1549, %v1222
      %v2087 = vmul.f32 %v1554, %v1223
      %v2088 = vmul.f32 %v1559, %v1224
      %v2089 = vmul.f32 %v1564, %v1225
      %v2090 = vmul.f32 %v1569, %v1226
      %v2091 = vmul.f32 %v1574, %v1227
      %v2092 = vmul.f32 %v1579, %v1228
      %v2093 = vmul.f32 %v1584, %v1229
      %v2094 = vmul.f32 %v1589, %v1230
      %v2095 = vmul.f32 %v1594, %v1231
      %v2096 = vmul.f32 %v1599, %v1232
      %v2097 = vmul.f32 %v1604, %v1233
      %v2098 = vmul.f32 %v1609, %v1234
      %v2099 = vmul.f32 %v1614, %v1235
      %v2100 = vmul.f32 %v1619, %v1236
      %v2101 = vmul.f32 %v1624, %v1237
      %v2102 = vmul.f32 %v1629, %v1238
      %v2103 = vmul.f32 %v1634, %v1239
      %v2104 = vmul.f32 %v1639, %v1240
      %v2105 = vmul.f32 %v1644, %v1241
      %v2106 = vmul.f32 %v1649, %v1242
      %v2107 = vmul.f32 %v1654, %v1243
      %v2108 = vmul.f32 %v1659, %v1244
      %v2109 = vmul.f32 %v1664, %v1245
      %v2110 = vmul.f32 %v1669, %v1246
      %v2111 = vmul.f32 %v1674, %v1247
      %v2112 = vmul.f32 %v1679, %v1248
      %v2113 = vmul.f32 %v1684, %v1249
      %v2114 = vmul.f32 %v1689, %v1250
      %v2115 = vmul.f32 %v1694, %v1251
      %v2116 = vmul.f32 %v1699, %v1252
      %v2117 = vmul.f32 %v1704, %v1253
      %v2118 = vmul.f32 %v1709, %v1254
      %v2119 = vmul.f32 %v1714, %v1255
      %v2120 = vmul.f32 %v1719, %v1256
      %v2121 = vmul.f32 %v1724, %v1257
      %v2122 = vmul.f32 %v1729, %v1258
      %v2123 = vmul.f32 %v1734, %v1259
      %v2124 = vmul.f32 %v1739, %v1260
      %v2125 = vmul.f32 %v1744, %v1261
      %v2126 = vmul.f32 %v1749, %v1262
      %v2127 = vmul.f32 %v1754, %v1263
      %v2128 = vmul.f32 %v1759, %v1264
      %v2129 = vmul.f32 %v1764, %v1265
      %v2130 = vmul.f32 %v1769, %v1266
      %v2131 = vmul.f32 %v1774, %v1267
      %v2132 = vmul.f32 %v1779, %v1268
      %v2133 = vmul.f32 %v1784, %v1269
      %v2134 = vmul.f32 %v1789, %v1270
      %v2135 = vmul.f32 %v1794, %v1271
      %v2136 = vmul.f32 %v1799, %v1272
      %v2137 = vmul.f32 %v1804, %v1273
      %v2138 = vmul.f32 %v1809, %v1274
      %v2139 = vmul.f32 %v1814, %v1275
      %v2140 = vmul.f32 %v1819, %v1276
      %v2141 = vmul.f32 %v1824, %v1277
      %v2142 = vmul.f32 %v1829, %v1278
      %v2143 = vmul.f32 %v1834, %v1279
      %v2144 = vmul.f32 %v1839, %v1280
      %v2145 = vmul.f32 %v1844, %v1281
      %v2146 = vmul.f32 %v1849, %v1282
      %v2147 = vmul.f32 %v1854, %v1283
      %v2148 = vmul.f32 %v1859, %v1284
      %v2149 = vmul.f32 %v1864, %v1285
      %v2150 = vmul.f32 %v1869, %v1286
      %v2151 = vmul.f32 %v1874, %v1287
      %v2152 = vmul.f32 %v1879, %v1288
      %v2153 = vmul.f32 %v1884, %v1289
      %v2154 = vmul.f32 %v1889, %v1290
      %v2155 = vmul.f32 %v1894, %v1291
      %v2156 = vmul.f32 %v1899, %v1292
      %v2157 = vmul.f32 %v1904, %v1293
      %v2158 = vmul.f32 %v1909, %v1294
      %v2159 = vmul.f32 %v1914, %v1295
      %v2160 = vmul.f32 %v1919, %v1296
      %v2161 = vmul.f32 %v1924, %v1297
      %v2162 = vmul.f32 %v1929, %v1298
      %v2163 = vmul.f32 %v1934, %v1299
      %v2164 = vmul.f32 %v1939, %v1300
      %v2165 = vmul.f32 %v1944, %v1301
      %v2166 = vmul.f32 %v1949, %v1302
      %v2167 = vmul.f32 %v1954, %v1303
      %v2168 = vmul.f32 %v1959, %v1304
      %v2169 = vmul.f32 %v1964, %v1305
      %v2170 = vmul.f32 %v1969, %v1306
      %v2171 = vmul.f32 %v1974, %v1307
      %v2172 = vmul.f32 %v1979, %v1308
      %v2173 = vmul.f32 %v1984, %v1309
      %v2174 = vmul.f32 %v1989, %v1310
      %v2175 = vmul.f32 %v1994, %v1311
      %v2176 = vmul.f32 %v1999, %v1312
      %v2177 = vmul.f32 %v2004, %v1313
      %v2178 = vmul.f32 %v2009, %v1314
      %v2179 = vmul.f32 %v2014, %v1315
      %v2180 = vmul.f32 %v2019, %v1316
      %v2181 = vmul.f32 %v2024, %v1317
      %v2182 = vmul.f32 %v2029, %v1318
      %v2183 = vmul.f32 %v2034, %v1319
      %v2184 = vmul.f32 %v2039, %v1320
      %vm2185 = vcmask 400384
      %2186 = vst.msk [vmem:[%s167] sm:$0xff] %vm2185, %v2041
      %2187 = vst.msk [vmem:[%s167 + $0x8] sm:$0xff] %vm2185, %v2042
      %2188 = vst.msk [vmem:[%s167 + $0x10] sm:$0xff] %vm2185, %v2043
      %2189 = vst.msk [vmem:[%s167 + $0x18] sm:$0xff] %vm2185, %v2044
      %2190 = vst.msk [vmem:[%s167 + $0x20] sm:$0xff] %vm2185, %v2045
      %2191 = vst.msk [vmem:[%s167 + $0x28] sm:$0xff] %vm2185, %v2046
      %2192 = vst.msk [vmem:[%s167 + $0x30] sm:$0xff] %vm2185, %v2047
      %2193 = vst.msk [vmem:[%s167 + $0x38] sm:$0xff] %vm2185, %v2048
      %2194 = vst.msk [vmem:[%s167 + $0x40] sm:$0xff] %vm2185, %v2049
      %2195 = vst.msk [vmem:[%s167 + $0x48] sm:$0xff] %vm2185, %v2050
      %2196 = vst.msk [vmem:[%s167 + $0x50] sm:$0xff] %vm2185, %v2051
      %2197 = vst.msk [vmem:[%s167 + $0x58] sm:$0xff] %vm2185, %v2052
      %2198 = vst.msk [vmem:[%s167 + $0x60] sm:$0xff] %vm2185, %v2053
      %2199 = vst.msk [vmem:[%s167 + $0x68] sm:$0xff] %vm2185, %v2054
      %2200 = vst.msk [vmem:[%s167 + $0x70] sm:$0xff] %vm2185, %v2055
      %2201 = vst.msk [vmem:[%s167 + $0x78] sm:$0xff] %vm2185, %v2056
      %2202 = vst.msk [vmem:[%s167 + $0x80] sm:$0xff] %vm2185, %v2057
      %2203 = vst.msk [vmem:[%s167 + $0x88] sm:$0xff] %vm2185, %v2058
      %2204 = vst.msk [vmem:[%s167 + $0x90] sm:$0xff] %vm2185, %v2059
      %2205 = vst.msk [vmem:[%s167 + $0x98] sm:$0xff] %vm2185, %v2060
      %2206 = vst.msk [vmem:[%s167 + $0xa0] sm:$0xff] %vm2185, %v2061
      %2207 = vst.msk [vmem:[%s167 + $0xa8] sm:$0xff] %vm2185, %v2062
      %2208 = vst.msk [vmem:[%s167 + $0xb0] sm:$0xff] %vm2185, %v2063
      %2209 = vst.msk [vmem:[%s167 + $0xb8] sm:$0xff] %vm2185, %v2064
      %2210 = vst.msk [vmem:[%s167 + $0xc0] sm:$0xff] %vm2185, %v2065
      %2211 = vst.msk [vmem:[%s167 + $0xc8] sm:$0xff] %vm2185, %v2066
      %2212 = vst.msk [vmem:[%s167 + $0xd0] sm:$0xff] %vm2185, %v2067
      %2213 = vst.msk [vmem:[%s167 + $0xd8] sm:$0xff] %vm2185, %v2068
      %2214 = vst.msk [vmem:[%s167 + $0xe0] sm:$0xff] %vm2185, %v2069
      %2215 = vst.msk [vmem:[%s167 + $0xe8] sm:$0xff] %vm2185, %v2070
      %2216 = vst.msk [vmem:[%s167 + $0xf0] sm:$0xff] %vm2185, %v2071
      %2217 = vst.msk [vmem:[%s167 + $0xf8] sm:$0xff] %vm2185, %v2072
      %2218 = vst.msk [vmem:[%s167 + $0x100] sm:$0xff] %vm2185, %v2073
      %2219 = vst.msk [vmem:[%s167 + $0x108] sm:$0xff] %vm2185, %v2074
      %2220 = vst.msk [vmem:[%s167 + $0x110] sm:$0xff] %vm2185, %v2075
      %2221 = vst.msk [vmem:[%s167 + $0x118] sm:$0xff] %vm2185, %v2076
      %2222 = vst.msk [vmem:[%s167 + $0x120] sm:$0xff] %vm2185, %v2077
      %2223 = vst.msk [vmem:[%s167 + $0x128] sm:$0xff] %vm2185, %v2078
      %2224 = vst.msk [vmem:[%s167 + $0x130] sm:$0xff] %vm2185, %v2079
      %2225 = vst.msk [vmem:[%s167 + $0x138] sm:$0xff] %vm2185, %v2080
      %2226 = vst.msk [vmem:[%s167 + $0x140] sm:$0xff] %vm2185, %v2081
      %2227 = vst.msk [vmem:[%s167 + $0x148] sm:$0xff] %vm2185, %v2082
      %2228 = vst.msk [vmem:[%s167 + $0x150] sm:$0xff] %vm2185, %v2083
      %2229 = vst.msk [vmem:[%s167 + $0x158] sm:$0xff] %vm2185, %v2084
      %2230 = vst.msk [vmem:[%s167 + $0x160] sm:$0xff] %vm2185, %v2085
      %2231 = vst.msk [vmem:[%s167 + $0x168] sm:$0xff] %vm2185, %v2086
      %2232 = vst.msk [vmem:[%s167 + $0x170] sm:$0xff] %vm2185, %v2087
      %2233 = vst.msk [vmem:[%s167 + $0x178] sm:$0xff] %vm2185, %v2088
      %2234 = vst.msk [vmem:[%s167 + $0x180] sm:$0xff] %vm2185, %v2089
      %2235 = vst.msk [vmem:[%s167 + $0x188] sm:$0xff] %vm2185, %v2090
      %2236 = vst.msk [vmem:[%s167 + $0x190] sm:$0xff] %vm2185, %v2091
      %2237 = vst.msk [vmem:[%s167 + $0x198] sm:$0xff] %vm2185, %v2092
      %2238 = vst.msk [vmem:[%s167 + $0x1a0] sm:$0xff] %vm2185, %v2093
      %2239 = vst.msk [vmem:[%s167 + $0x1a8] sm:$0xff] %vm2185, %v2094
      %2240 = vst.msk [vmem:[%s167 + $0x1b0] sm:$0xff] %vm2185, %v2095
      %2241 = vst.msk [vmem:[%s167 + $0x1b8] sm:$0xff] %vm2185, %v2096
      %2242 = vst.msk [vmem:[%s167 + $0x1c0] sm:$0xff] %vm2185, %v2097
      %2243 = vst.msk [vmem:[%s167 + $0x1c8] sm:$0xff] %vm2185, %v2098
      %2244 = vst.msk [vmem:[%s167 + $0x1d0] sm:$0xff] %vm2185, %v2099
      %2245 = vst.msk [vmem:[%s167 + $0x1d8] sm:$0xff] %vm2185, %v2100
      %2246 = vst.msk [vmem:[%s167 + $0x1e0] sm:$0xff] %vm2185, %v2101
      %2247 = vst.msk [vmem:[%s167 + $0x1e8] sm:$0xff] %vm2185, %v2102
      %2248 = vst.msk [vmem:[%s167 + $0x1f0] sm:$0xff] %vm2185, %v2103
      %2249 = vst.msk [vmem:[%s167 + $0x1f8] sm:$0xff] %vm2185, %v2104
      %2250 = vst.msk [vmem:[%s167 + $0x200] sm:$0xff] %vm2185, %v2105
      %2251 = vst.msk [vmem:[%s167 + $0x208] sm:$0xff] %vm2185, %v2106
      %2252 = vst.msk [vmem:[%s167 + $0x210] sm:$0xff] %vm2185, %v2107
      %2253 = vst.msk [vmem:[%s167 + $0x218] sm:$0xff] %vm2185, %v2108
      %2254 = vst.msk [vmem:[%s167 + $0x220] sm:$0xff] %vm2185, %v2109
      %2255 = vst.msk [vmem:[%s167 + $0x228] sm:$0xff] %vm2185, %v2110
      %2256 = vst.msk [vmem:[%s167 + $0x230] sm:$0xff] %vm2185, %v2111
      %2257 = vst.msk [vmem:[%s167 + $0x238] sm:$0xff] %vm2185, %v2112
      %2258 = vst.msk [vmem:[%s167 + $0x240] sm:$0xff] %vm2185, %v2113
      %2259 = vst.msk [vmem:[%s167 + $0x248] sm:$0xff] %vm2185, %v2114
      %2260 = vst.msk [vmem:[%s167 + $0x250] sm:$0xff] %vm2185, %v2115
      %2261 = vst.msk [vmem:[%s167 + $0x258] sm:$0xff] %vm2185, %v2116
      %2262 = vst.msk [vmem:[%s167 + $0x260] sm:$0xff] %vm2185, %v2117
      %2263 = vst.msk [vmem:[%s167 + $0x268] sm:$0xff] %vm2185, %v2118
      %2264 = vst.msk [vmem:[%s167 + $0x270] sm:$0xff] %vm2185, %v2119
      %2265 = vst.msk [vmem:[%s167 + $0x278] sm:$0xff] %vm2185, %v2120
      %2266 = vst.msk [vmem:[%s167 + $0x280] sm:$0xff] %vm2185, %v2121
      %2267 = vst.msk [vmem:[%s167 + $0x288] sm:$0xff] %vm2185, %v2122
      %2268 = vst.msk [vmem:[%s167 + $0x290] sm:$0xff] %vm2185, %v2123
      %2269 = vst.msk [vmem:[%s167 + $0x298] sm:$0xff] %vm2185, %v2124
      %2270 = vst.msk [vmem:[%s167 + $0x2a0] sm:$0xff] %vm2185, %v2125
      %2271 = vst.msk [vmem:[%s167 + $0x2a8] sm:$0xff] %vm2185, %v2126
      %2272 = vst.msk [vmem:[%s167 + $0x2b0] sm:$0xff] %vm2185, %v2127
      %2273 = vst.msk [vmem:[%s167 + $0x2b8] sm:$0xff] %vm2185, %v2128
      %2274 = vst.msk [vmem:[%s167 + $0x2c0] sm:$0xff] %vm2185, %v2129
      %2275 = vst.msk [vmem:[%s167 + $0x2c8] sm:$0xff] %vm2185, %v2130
      %2276 = vst.msk [vmem:[%s167 + $0x2d0] sm:$0xff] %vm2185, %v2131
      %2277 = vst.msk [vmem:[%s167 + $0x2d8] sm:$0xff] %vm2185, %v2132
      %2278 = vst.msk [vmem:[%s167 + $0x2e0] sm:$0xff] %vm2185, %v2133
      %2279 = vst.msk [vmem:[%s167 + $0x2e8] sm:$0xff] %vm2185, %v2134
      %2280 = vst.msk [vmem:[%s167 + $0x2f0] sm:$0xff] %vm2185, %v2135
      %2281 = vst.msk [vmem:[%s167 + $0x2f8] sm:$0xff] %vm2185, %v2136
      %2282 = vst.msk [vmem:[%s167 + $0x300] sm:$0xff] %vm2185, %v2137
      %2283 = vst.msk [vmem:[%s167 + $0x308] sm:$0xff] %vm2185, %v2138
      %2284 = vst.msk [vmem:[%s167 + $0x310] sm:$0xff] %vm2185, %v2139
      %2285 = vst.msk [vmem:[%s167 + $0x318] sm:$0xff] %vm2185, %v2140
      %2286 = vst.msk [vmem:[%s167 + $0x320] sm:$0xff] %vm2185, %v2141
      %2287 = vst.msk [vmem:[%s167 + $0x328] sm:$0xff] %vm2185, %v2142
      %2288 = vst.msk [vmem:[%s167 + $0x330] sm:$0xff] %vm2185, %v2143
      %2289 = vst.msk [vmem:[%s167 + $0x338] sm:$0xff] %vm2185, %v2144
      %2290 = vst.msk [vmem:[%s167 + $0x340] sm:$0xff] %vm2185, %v2145
      %2291 = vst.msk [vmem:[%s167 + $0x348] sm:$0xff] %vm2185, %v2146
      %2292 = vst.msk [vmem:[%s167 + $0x350] sm:$0xff] %vm2185, %v2147
      %2293 = vst.msk [vmem:[%s167 + $0x358] sm:$0xff] %vm2185, %v2148
      %2294 = vst.msk [vmem:[%s167 + $0x360] sm:$0xff] %vm2185, %v2149
      %2295 = vst.msk [vmem:[%s167 + $0x368] sm:$0xff] %vm2185, %v2150
      %2296 = vst.msk [vmem:[%s167 + $0x370] sm:$0xff] %vm2185, %v2151
      %2297 = vst.msk [vmem:[%s167 + $0x378] sm:$0xff] %vm2185, %v2152
      %2298 = vst.msk [vmem:[%s167 + $0x380] sm:$0xff] %vm2185, %v2153
      %2299 = vst.msk [vmem:[%s167 + $0x388] sm:$0xff] %vm2185, %v2154
      %2300 = vst.msk [vmem:[%s167 + $0x390] sm:$0xff] %vm2185, %v2155
      %2301 = vst.msk [vmem:[%s167 + $0x398] sm:$0xff] %vm2185, %v2156
      %2302 = vst.msk [vmem:[%s167 + $0x3a0] sm:$0xff] %vm2185, %v2157
      %2303 = vst.msk [vmem:[%s167 + $0x3a8] sm:$0xff] %vm2185, %v2158
      %2304 = vst.msk [vmem:[%s167 + $0x3b0] sm:$0xff] %vm2185, %v2159
      %2305 = vst.msk [vmem:[%s167 + $0x3b8] sm:$0xff] %vm2185, %v2160
      %2306 = vst.msk [vmem:[%s167 + $0x3c0] sm:$0xff] %vm2185, %v2161
      %2307 = vst.msk [vmem:[%s167 + $0x3c8] sm:$0xff] %vm2185, %v2162
      %2308 = vst.msk [vmem:[%s167 + $0x3d0] sm:$0xff] %vm2185, %v2163
      %2309 = vst.msk [vmem:[%s167 + $0x3d8] sm:$0xff] %vm2185, %v2164
      %2310 = vst.msk [vmem:[%s167 + $0x3e0] sm:$0xff] %vm2185, %v2165
      %2311 = vst.msk [vmem:[%s167 + $0x3e8] sm:$0xff] %vm2185, %v2166
      %2312 = vst.msk [vmem:[%s167 + $0x3f0] sm:$0xff] %vm2185, %v2167
      %2313 = vst.msk [vmem:[%s167 + $0x3f8] sm:$0xff] %vm2185, %v2168
      %2314 = vst.msk [vmem:[%s167 + $0x400] sm:$0xff] %vm2185, %v2169
      %2315 = vst.msk [vmem:[%s167 + $0x408] sm:$0xff] %vm2185, %v2170
      %2316 = vst.msk [vmem:[%s167 + $0x410] sm:$0xff] %vm2185, %v2171
      %2317 = vst.msk [vmem:[%s167 + $0x418] sm:$0xff] %vm2185, %v2172
      %2318 = vst.msk [vmem:[%s167 + $0x420] sm:$0xff] %vm2185, %v2173
      %2319 = vst.msk [vmem:[%s167 + $0x428] sm:$0xff] %vm2185, %v2174
      %2320 = vst.msk [vmem:[%s167 + $0x430] sm:$0xff] %vm2185, %v2175
      %2321 = vst.msk [vmem:[%s167 + $0x438] sm:$0xff] %vm2185, %v2176
      %2322 = vst.msk [vmem:[%s167 + $0x440] sm:$0xff] %vm2185, %v2177
      %2323 = vst.msk [vmem:[%s167 + $0x448] sm:$0xff] %vm2185, %v2178
      %2324 = vst.msk [vmem:[%s167 + $0x450] sm:$0xff] %vm2185, %v2179
      %2325 = vst.msk [vmem:[%s167 + $0x458] sm:$0xff] %vm2185, %v2180
      %2326 = vst.msk [vmem:[%s167 + $0x460] sm:$0xff] %vm2185, %v2181
      %2327 = vst.msk [vmem:[%s167 + $0x468] sm:$0xff] %vm2185, %v2182
      %2328 = vst.msk [vmem:[%s167 + $0x470] sm:$0xff] %vm2185, %v2183
      %2329 = vst.msk [vmem:[%s167 + $0x478] sm:$0xff] %vm2185, %v2184
      %s2330 = smul.u32 144, %s13
      %p2331 = scmp.lt.s32.totalorder %s2330, 287
      %s2332 = scalar_select %p2331, %s2330, 287
      %s2333 = smul.addr %s2332, 8
      %s2334 = scalar_lea.vmem %s2, %s2333
      // Predicated region
      $region29: #{tpu_custom_call.1} parent=27 // pred_check
        %p2335 = pneg %p83
      $region30: #{tpu_custom_call.1} parent=27 // pred_check_branch
        %2337 = sbr.rel (%p2335) target = $region32
      $region31: #{tpu_custom_call.1} parent=27 // pred_region
        %s2338 = smul.u32 144, %s13
      $region32: #{tpu_custom_call.1} parent=27 // pred_fallthru
        _
    $region28: #{tpu_custom_call.1} parent=5 // pred_fallthru
      _
    %p2339 = scmp.le.s32.totalorder 2, %s8
    // Predicated region
    $region33: #{tpu_custom_call.1} parent=5 // pred_check
      %p2340 = pneg %p2339
    $region34: #{tpu_custom_call.1} parent=5 // pred_check_branch
      %2342 = sbr.rel (%p2340) target = $region36
    $region35: #{tpu_custom_call.1} parent=5 // pred_region
      %s2343 = ssub.s32 %s8, 2
      // Predicated region
      $region37: #{tpu_custom_call.1} parent=35 // pred_check
        %p2344 = pneg %p89
      $region38: #{tpu_custom_call.1} parent=35 // pred_check_branch
        %2346 = sbr.rel (%p2344) target = $region40
      $region39: #{tpu_custom_call.1} parent=35 // pred_region
        %s2347 = smul.u32 144, %s14
        %p2348 = scmp.lt.s32.totalorder %s2347, 287
        %s2349 = scalar_select %p2348, %s2347, 287
        %s2350 = smul.addr %s2349, 8
        %s2351 = scalar_lea.vmem %s2, %s2350
      $region40: #{tpu_custom_call.1} parent=35 // pred_fallthru
        _
    $region36: #{tpu_custom_call.1} parent=5 // pred_fallthru
      _
  $region6: #{tpu_custom_call.1} parent=0 // loop_footer
    %s12 = sadd.s32 1, %s8
  $region7: #{tpu_custom_call.1} parent=0 // loop_footer_branch
    %7 = sbr.rel target = $region3
  $region8: #{tpu_custom_call.1} parent=0 // loop_exit
    _

</llo_original>
